<compile_context>
chip_gen: v7x
topology: tpu7x:2x2x1
jax: 0.10.0
libtpu: 0.0.40
codegen_flags: <defaults>
</compile_context>

<pallas_src>
import functools

import jax
import jax.numpy as jnp
from jax import lax
from jax.experimental import pallas as pl
from jax.experimental.pallas import tpu as pltpu


def _softplus(x):
    # numerically stable log1p(exp(x)) (identical to log1p(exp(x)) for x <= 0)
    return jnp.maximum(x, 0.0) + jnp.log1p(jnp.exp(-jnp.abs(x)))


def _bayesian_linear_kernel(x_ref, w_mu_ref, w_rho_ref, lam_ref,
                            b_mu_ref, b_rho_ref, eps_ref,
                            act_ref, klp_ref,
                            eb_acc, vb_acc, kl_acc,
                            *, in_true, out_true, tk, tn, mxu_dtype):
    j = pl.program_id(0)            # Out tile index ("parallel")
    k = pl.program_id(1)            # In  tile index (reduction, innermost, "arbitrary")
    nk = pl.num_programs(1)

    # ---- init accumulators + bias KL (once per Out tile) ----------------------
    @pl.when(k == 0)
    def _():
        eb_acc[...] = jnp.zeros_like(eb_acc)
        vb_acc[...] = jnp.zeros_like(vb_acc)
        b_mu = b_mu_ref[...]                              # [1, tn]
        b_sigma = _softplus(b_rho_ref[...])
        out_idx = j * tn + lax.broadcasted_iota(jnp.int32, b_mu.shape, 1)
        kl_b = jnp.where(out_idx < out_true,
                         -jnp.log(b_sigma) - 0.5
                         + 0.5 * (b_sigma * b_sigma + b_mu * b_mu),
                         0.0)
        kl_acc[0] = jnp.sum(kl_b)

    # ---- per-tile parameter transforms (VPU / EUP) -----------------------------
    w_mu = w_mu_ref[...]            # [tk, tn] in [In, Out] layout -> no MXU-feed transpose
    w_rho = w_rho_ref[...]
    lam = lam_ref[...]

    alpha_q = 1.0 / (1.0 + jnp.exp(-lam))
    w_sigma = _softplus(w_rho)

    e_w = w_mu * alpha_q
    var_w = alpha_q * (w_sigma * w_sigma + (1.0 - alpha_q) * (w_mu * w_mu))

    # ---- MXU: accumulate partial products over the In (reduction) axis ---------
    x = x_ref[...]                  # [B, tk]
    eb_acc[...] += jnp.dot(x.astype(mxu_dtype), e_w.astype(mxu_dtype),
                           preferred_element_type=jnp.float32)
    x2 = x * x
    vb_acc[...] += jnp.dot(x2.astype(mxu_dtype), var_w.astype(mxu_dtype),
                           preferred_element_type=jnp.float32)

    # ---- weight KL for this tile (iota-masked so padding contributes exactly 0) -
    in_idx = k * tk + lax.broadcasted_iota(jnp.int32, (tk, tn), 0)
    out_idx = j * tn + lax.broadcasted_iota(jnp.int32, (tk, tn), 1)
    valid = (in_idx < in_true) & (out_idx < out_true)
    a_cl = jnp.clip(alpha_q, 1e-6, 1.0 - 1e-6)            # guards 0*log(0) NaNs
    kl_w = (alpha_q * (-jnp.log(w_sigma) - 0.5 + jnp.log(a_cl / 0.25)
                       + 0.5 * (w_sigma * w_sigma + w_mu * w_mu))
            + (1.0 - alpha_q) * jnp.log((1.0 - a_cl) / 0.75))
    kl_acc[0] += jnp.sum(jnp.where(valid, kl_w, 0.0))

    # ---- finalize on the last In step ------------------------------------------
    @pl.when(k == nk - 1)
    def _():
        b_mu = b_mu_ref[...]
        b_sigma = _softplus(b_rho_ref[...])
        e_b = eb_acc[...] + b_mu
        var_b = vb_acc[...] + b_sigma * b_sigma
        # TODO(synk): optionally generate eps in-kernel (pltpu.prng_seed + prng_random_bits)
        # to drop the [B, Out] HBM read; kept as an input for bitwise reproducibility.
        act_ref[...] = (e_b + jnp.sqrt(var_b) * eps_ref[...]).astype(act_ref.dtype)

        # Per-Out-tile KL partial, written as one lane-dense (8,128) block with the
        # scalar at [0,0] and zeros elsewhere; the wrapper just sums everything.
        r = lax.broadcasted_iota(jnp.int32, (8, 128), 0)
        c = lax.broadcasted_iota(jnp.int32, (8, 128), 1)
        klp_ref[...] = jnp.where((r == 0) & (c == 0), kl_acc[0], 0.0)


def _round_up(x, m):
    return (x + m - 1) // m * m


def bayesian_linear_forward(x, weight_mu, weight_rho, lambdal, bias_mu, bias_rho, eps,
                            *, tile_n=512, tile_k=512, mxu_dtype=jnp.float32,
                            vmem_limit_bytes=32 * 1024 * 1024):
    """Training/sample-path forward of BayesianLinear. Returns (activations, kl)."""
    B, In = x.shape
    Out = weight_mu.shape[0]
    f32 = jnp.float32

    # Lane-dense tiles (multiples of 128 on both the K and N axes), clamped to the
    # problem size.  512x512 f32 double-buffered stays well inside v5e/v6e/v7x VMEM.
    tn = min(tile_n, _round_up(Out, 128))
    tk = min(tile_k, _round_up(In, 128))
    out_p = _round_up(Out, tn)
    in_p = _round_up(In, tk)
    b_p = _round_up(B, 8)

    def pad2(a, rows, cols):
        return jnp.pad(a, ((0, rows - a.shape[0]), (0, cols - a.shape[1])))

    # Pre-transposed [In, Out] weight layout (pure layout plumbing in the wrapper).
    x_p = pad2(x.astype(f32), b_p, in_p)
    eps_p = pad2(eps.astype(f32), b_p, out_p)
    w_mu_t = pad2(weight_mu.astype(f32).T, in_p, out_p)
    w_rho_t = pad2(weight_rho.astype(f32).T, in_p, out_p)
    lam_t = pad2(lambdal.astype(f32).T, in_p, out_p)
    b_mu2 = pad2(bias_mu.astype(f32).reshape(1, Out), 1, out_p)
    b_rho2 = pad2(bias_rho.astype(f32).reshape(1, Out), 1, out_p)

    n_j = out_p // tn
    n_k = in_p // tk

    kernel = functools.partial(_bayesian_linear_kernel,
                               in_true=In, out_true=Out, tk=tk, tn=tn,
                               mxu_dtype=mxu_dtype)

    grid_spec = pltpu.PrefetchScalarGridSpec(
        num_scalar_prefetch=0,
        grid=(n_j, n_k),
        in_specs=[
            pl.BlockSpec((b_p, tk), lambda j, k: (0, k)),      # x
            pl.BlockSpec((tk, tn), lambda j, k: (k, j)),       # weight_mu^T
            pl.BlockSpec((tk, tn), lambda j, k: (k, j)),       # weight_rho^T
            pl.BlockSpec((tk, tn), lambda j, k: (k, j)),       # lambdal^T
            pl.BlockSpec((1, tn), lambda j, k: (0, j)),        # bias_mu
            pl.BlockSpec((1, tn), lambda j, k: (0, j)),        # bias_rho
            pl.BlockSpec((b_p, tn), lambda j, k: (0, j)),      # eps
        ],
        out_specs=(
            pl.BlockSpec((b_p, tn), lambda j, k: (0, j)),          # activations
            pl.BlockSpec((None, 8, 128), lambda j, k: (j, 0, 0)),  # per-Out-tile KL
        ),
        scratch_shapes=[
            pltpu.VMEM((b_p, tn), jnp.float32),   # e_b accumulator
            pltpu.VMEM((b_p, tn), jnp.float32),   # var_b accumulator
            pltpu.SMEM((1,), jnp.float32),        # KL accumulator (per Out tile)
        ],
    )

    act_p, kl_parts = pl.pallas_call(
        kernel,
        grid_spec=grid_spec,
        out_shape=(jax.ShapeDtypeStruct((b_p, out_p), x.dtype),
                   jax.ShapeDtypeStruct((n_j, 8, 128), jnp.float32)),
        compiler_params=pltpu.CompilerParams(
            dimension_semantics=("parallel", "arbitrary"),
            vmem_limit_bytes=vmem_limit_bytes),
    )(x_p, w_mu_t, w_rho_t, lam_t, b_mu2, b_rho2, eps_p)

    return act_p[:B, :Out], jnp.sum(kl_parts)


def _reference(x, weight_mu, weight_rho, lambdal, bias_mu, bias_rho, eps):
    alpha_q = 1.0 / (1.0 + jnp.exp(-lambdal))
    w_sigma = jnp.log1p(jnp.exp(weight_rho))
    b_sigma = jnp.log1p(jnp.exp(bias_rho))
    e_w = weight_mu * alpha_q
    var_w = alpha_q * (w_sigma ** 2 + (1 - alpha_q) * weight_mu ** 2)
    e_b = x @ e_w.T + bias_mu
    var_b = (x ** 2) @ var_w.T + b_sigma ** 2
    act = e_b + jnp.sqrt(var_b) * eps
    kl_bias = jnp.sum(jnp.log(1.0 / b_sigma) - 0.5 + (b_sigma ** 2 + bias_mu ** 2) / 2.0)
    kl_weight = jnp.sum(alpha_q * (jnp.log(1.0 / w_sigma) - 0.5
                                   + jnp.log(alpha_q / 0.25)
                                   + (w_sigma ** 2 + weight_mu ** 2) / 2.0)
                        + (1 - alpha_q) * jnp.log((1 - alpha_q) / 0.75))
    return act, kl_bias + kl_weight


if __name__ == "__main__":
    B, In, Out = 8, 32, 16   # small shapes consistent with a Linear(in=32, out=16)
    key = jax.random.PRNGKey(0)
    k = jax.random.split(key, 7)

    # Deterministic inputs matching the PyTorch __init__ ranges.
    x = jax.random.normal(k[0], (B, In), dtype=jnp.float32)
    weight_mu = jax.random.uniform(k[1], (Out, In), minval=-0.01, maxval=0.01, dtype=jnp.float32)
    weight_rho = jax.random.uniform(k[2], (Out, In), minval=-5.0, maxval=-4.0, dtype=jnp.float32)
    lambdal = jax.random.uniform(k[3], (Out, In), minval=1.5, maxval=2.5, dtype=jnp.float32)
    bias_mu = jax.random.uniform(k[4], (Out,), minval=-0.01, maxval=0.01, dtype=jnp.float32)
    bias_rho = jax.random.uniform(k[5], (Out,), minval=-5.0, maxval=-4.0, dtype=jnp.float32)
    eps = jax.random.normal(k[6], (B, Out), dtype=jnp.float32)   # torch.randn equivalent

    act, kl = bayesian_linear_forward(x, weight_mu, weight_rho, lambdal,
                                      bias_mu, bias_rho, eps)
    act = jax.block_until_ready(act)
    kl = jax.block_until_ready(kl)

    act_ref, kl_ref = _reference(x, weight_mu, weight_rho, lambdal, bias_mu, bias_rho, eps)
    assert jnp.allclose(act, act_ref, atol=1e-5, rtol=1e-5), "activation mismatch"
    assert jnp.allclose(kl, kl_ref, rtol=1e-4, atol=1e-3), "KL mismatch"

    print("KERNEL_OK")
</pallas_src>

<mosaic_0001>
module attributes {stable_mosaic.version = 11 : i64} {
  func.func @_bayesian_linear_kernel(%arg0: i32, %arg1: i32, %arg2: memref<8x128xf32, #tpu.memory_space<vmem>>, %arg3: memref<128x128xf32, #tpu.memory_space<vmem>>, %arg4: memref<128x128xf32, #tpu.memory_space<vmem>>, %arg5: memref<128x128xf32, #tpu.memory_space<vmem>>, %arg6: memref<1x128xf32, #tpu.memory_space<vmem>>, %arg7: memref<1x128xf32, #tpu.memory_space<vmem>>, %arg8: memref<8x128xf32, #tpu.memory_space<vmem>>, %arg9: memref<8x128xf32, #tpu.memory_space<vmem>>, %arg10: memref<1x8x128xf32, #tpu.memory_space<vmem>>, %arg11: memref<8x128xf32, #tpu.memory_space<vmem>>, %arg12: memref<8x128xf32, #tpu.memory_space<vmem>>, %arg13: memref<1xf32, #tpu.memory_space<smem>>) attributes {dimension_semantics = [#tpu.dimension_semantics<parallel>, #tpu.dimension_semantics<arbitrary>], iteration_bounds = array<i64: 1, 1>, scalar_prefetch = 0 : i64, scratch_operands = 3 : i64, tpu.core_type = #tpu.core_type<tc>, window_params = [{transform_indices = @transform_0, window_bounds = array<i64: 8, 128>}, {transform_indices = @transform_1, window_bounds = array<i64: 128, 128>}, {transform_indices = @transform_2, window_bounds = array<i64: 128, 128>}, {transform_indices = @transform_3, window_bounds = array<i64: 128, 128>}, {transform_indices = @transform_4, window_bounds = array<i64: 1, 128>}, {transform_indices = @transform_5, window_bounds = array<i64: 1, 128>}, {transform_indices = @transform_6, window_bounds = array<i64: 8, 128>}, {transform_indices = @transform_7, window_bounds = array<i64: 8, 128>}, {transform_indices = @transform_8, window_bounds = array<i64: 1, 8, 128>}]} {
    %c0_i32 = arith.constant 0 : i32
    %0 = arith.cmpi eq, %arg1, %c0_i32 : i32
    %1 = arith.extui %0 : i1 to i32
    %c0_i32_0 = arith.constant 0 : i32
    %2 = arith.cmpi ne, %1, %c0_i32_0 : i32
    scf.if %2 {
      %cst_39 = arith.constant 0.000000e+00 : f32
      %93 = vector.broadcast %cst_39 : f32 to vector<8x128xf32>
      %c0_40 = arith.constant 0 : index
      %c0_41 = arith.constant 0 : index
      %94 = vector.load %arg11[%c0_40, %c0_41] : memref<8x128xf32, #tpu.memory_space<vmem>>, vector<8x128xf32>
      tpu.vector_store %arg11[%c0_40, %c0_41], %93 {strides = array<i32>} : memref<8x128xf32, #tpu.memory_space<vmem>>, vector<8x128xf32>,
      %cst_42 = arith.constant 0.000000e+00 : f32
      %95 = vector.broadcast %cst_42 : f32 to vector<8x128xf32>
      %c0_43 = arith.constant 0 : index
      %c0_44 = arith.constant 0 : index
      %96 = vector.load %arg12[%c0_43, %c0_44] : memref<8x128xf32, #tpu.memory_space<vmem>>, vector<8x128xf32>
      tpu.vector_store %arg12[%c0_43, %c0_44], %95 {strides = array<i32>} : memref<8x128xf32, #tpu.memory_space<vmem>>, vector<8x128xf32>,
      %c0_45 = arith.constant 0 : index
      %c0_46 = arith.constant 0 : index
      %97 = vector.load %arg6[%c0_45, %c0_46] : memref<1x128xf32, #tpu.memory_space<vmem>>, vector<1x128xf32>
      %c0_47 = arith.constant 0 : index
      %c0_48 = arith.constant 0 : index
      %98 = vector.load %arg7[%c0_47, %c0_48] : memref<1x128xf32, #tpu.memory_space<vmem>>, vector<1x128xf32>
      %cst_49 = arith.constant 0.000000e+00 : f32
      %99 = vector.broadcast %cst_49 : f32 to vector<1x128xf32>
      %100 = arith.maximumf %98, %99 : vector<1x128xf32>
      %101 = math.absf %98 : vector<1x128xf32>
      %cst_50 = arith.constant 0.000000e+00 : f32
      %102 = vector.broadcast %cst_50 : f32 to vector<1x128xf32>
      %103 = arith.subf %102, %101 : vector<1x128xf32>
      %104 = math.exp %103 : vector<1x128xf32>
      %105 = math.log1p %104 : vector<1x128xf32>
      %106 = arith.addf %100, %105 : vector<1x128xf32>
      %c128_i32_51 = arith.constant 128 : i32
      %107 = arith.muli %arg0, %c128_i32_51 : i32
      %108 = tpu.iota {dimensions = array<i32: 1>} : vector<1x128xi32>
      %109 = vector.broadcast %107 : i32 to vector<1x128xi32>
      %110 = arith.addi %109, %108 : vector<1x128xi32>
      %c16_i32_52 = arith.constant 16 : i32
      %111 = vector.broadcast %c16_i32_52 : i32 to vector<1x128xi32>
      %112 = arith.cmpi slt, %110, %111 : vector<1x128xi32>
      %113 = math.log %106 : vector<1x128xf32>
      %cst_53 = arith.constant 0.000000e+00 : f32
      %114 = vector.broadcast %cst_53 : f32 to vector<1x128xf32>
      %115 = arith.subf %114, %113 : vector<1x128xf32>
      %cst_54 = arith.constant 5.000000e-01 : f32
      %116 = vector.broadcast %cst_54 : f32 to vector<1x128xf32>
      %117 = arith.subf %115, %116 : vector<1x128xf32>
      %118 = arith.mulf %106, %106 : vector<1x128xf32>
      %119 = arith.mulf %97, %97 : vector<1x128xf32>
      %120 = arith.addf %118, %119 : vector<1x128xf32>
      %cst_55 = arith.constant 5.000000e-01 : f32
      %121 = vector.broadcast %cst_55 : f32 to vector<1x128xf32>
      %122 = arith.mulf %121, %120 : vector<1x128xf32>
      %123 = arith.addf %117, %122 : vector<1x128xf32>
      %cst_56 = arith.constant 0.000000e+00 : f32
      %124 = vector.broadcast %cst_56 : f32 to vector<1x128xf32>
      %125 = arith.select %112, %123, %124 : vector<1x128xi1>, vector<1x128xf32>
      %126 = vector.shape_cast %125 : vector<1x128xf32> to vector<1x1x128xf32>
      %cst_57 = arith.constant dense<0.000000e+00> : vector<1xf32>
      %127 = vector.multi_reduction <add>, %126, %cst_57 [1, 2] : vector<1x1x128xf32> to vector<1xf32>
      %128 = vector.shape_cast %127 : vector<1xf32> to vector<1x1x1xf32>
      %129 = vector.extract %128[0, 0, 0] : f32 from vector<1x1x1xf32>
      %c0_58 = arith.constant 0 : index
      %130 = memref.load %arg13[%c0_58] : memref<1xf32, #tpu.memory_space<smem>>
      memref.store %129, %arg13[%c0_58] : memref<1xf32, #tpu.memory_space<smem>>
    } else {
    }
    %c0 = arith.constant 0 : index
    %c0_1 = arith.constant 0 : index
    %3 = vector.load %arg3[%c0, %c0_1] : memref<128x128xf32, #tpu.memory_space<vmem>>, vector<128x128xf32>
    %c0_2 = arith.constant 0 : index
    %c0_3 = arith.constant 0 : index
    %4 = vector.load %arg4[%c0_2, %c0_3] : memref<128x128xf32, #tpu.memory_space<vmem>>, vector<128x128xf32>
    %c0_4 = arith.constant 0 : index
    %c0_5 = arith.constant 0 : index
    %5 = vector.load %arg5[%c0_4, %c0_5] : memref<128x128xf32, #tpu.memory_space<vmem>>, vector<128x128xf32>
    %cst = arith.constant 0.000000e+00 : f32
    %6 = vector.broadcast %cst : f32 to vector<128x128xf32>
    %7 = arith.subf %6, %5 : vector<128x128xf32>
    %8 = math.exp %7 : vector<128x128xf32>
    %cst_6 = arith.constant 1.000000e+00 : f32
    %9 = vector.broadcast %cst_6 : f32 to vector<128x128xf32>
    %10 = arith.addf %9, %8 : vector<128x128xf32>
    %cst_7 = arith.constant 1.000000e+00 : f32
    %11 = vector.broadcast %cst_7 : f32 to vector<128x128xf32>
    %12 = arith.divf %11, %10 : vector<128x128xf32>
    %cst_8 = arith.constant 0.000000e+00 : f32
    %13 = vector.broadcast %cst_8 : f32 to vector<128x128xf32>
    %14 = arith.maximumf %4, %13 : vector<128x128xf32>
    %15 = math.absf %4 : vector<128x128xf32>
    %cst_9 = arith.constant 0.000000e+00 : f32
    %16 = vector.broadcast %cst_9 : f32 to vector<128x128xf32>
    %17 = arith.subf %16, %15 : vector<128x128xf32>
    %18 = math.exp %17 : vector<128x128xf32>
    %19 = math.log1p %18 : vector<128x128xf32>
    %20 = arith.addf %14, %19 : vector<128x128xf32>
    %21 = arith.mulf %3, %12 : vector<128x128xf32>
    %22 = arith.mulf %20, %20 : vector<128x128xf32>
    %cst_10 = arith.constant 1.000000e+00 : f32
    %23 = vector.broadcast %cst_10 : f32 to vector<128x128xf32>
    %24 = arith.subf %23, %12 : vector<128x128xf32>
    %25 = arith.mulf %3, %3 : vector<128x128xf32>
    %26 = arith.mulf %24, %25 : vector<128x128xf32>
    %27 = arith.addf %22, %26 : vector<128x128xf32>
    %28 = arith.mulf %12, %27 : vector<128x128xf32>
    %c0_11 = arith.constant 0 : index
    %c0_12 = arith.constant 0 : index
    %29 = vector.load %arg2[%c0_11, %c0_12] : memref<8x128xf32, #tpu.memory_space<vmem>>, vector<8x128xf32>
    %c0_13 = arith.constant 0 : index
    %c0_14 = arith.constant 0 : index
    %30 = vector.load %arg11[%c0_13, %c0_14] : memref<8x128xf32, #tpu.memory_space<vmem>>, vector<8x128xf32>
    %cst_15 = arith.constant dense<0.000000e+00> : vector<8x128xf32>
    %31 = tpu.matmul %29, %21, %cst_15 {dimension_numbers = #tpu.dot_dimension_numbers<[1], [0], [0], [1], [0, 0, 1, 1], [], []>} : vector<8x128xf32>, vector<128x128xf32>, vector<8x128xf32> -> vector<8x128xf32>
    %32 = arith.addf %30, %31 : vector<8x128xf32>
    %c0_16 = arith.constant 0 : index
    %c0_17 = arith.constant 0 : index
    %33 = vector.load %arg11[%c0_16, %c0_17] : memref<8x128xf32, #tpu.memory_space<vmem>>, vector<8x128xf32>
    tpu.vector_store %arg11[%c0_16, %c0_17], %32 {strides = array<i32>} : memref<8x128xf32, #tpu.memory_space<vmem>>, vector<8x128xf32>,
    %34 = arith.mulf %29, %29 : vector<8x128xf32>
    %c0_18 = arith.constant 0 : index
    %c0_19 = arith.constant 0 : index
    %35 = vector.load %arg12[%c0_18, %c0_19] : memref<8x128xf32, #tpu.memory_space<vmem>>, vector<8x128xf32>
    %cst_20 = arith.constant dense<0.000000e+00> : vector<8x128xf32>
    %36 = tpu.matmul %34, %28, %cst_20 {dimension_numbers = #tpu.dot_dimension_numbers<[1], [0], [0], [1], [0, 0, 1, 1], [], []>} : vector<8x128xf32>, vector<128x128xf32>, vector<8x128xf32> -> vector<8x128xf32>
    %37 = arith.addf %35, %36 : vector<8x128xf32>
    %c0_21 = arith.constant 0 : index
    %c0_22 = arith.constant 0 : index
    %38 = vector.load %arg12[%c0_21, %c0_22] : memref<8x128xf32, #tpu.memory_space<vmem>>, vector<8x128xf32>
    tpu.vector_store %arg12[%c0_21, %c0_22], %37 {strides = array<i32>} : memref<8x128xf32, #tpu.memory_space<vmem>>, vector<8x128xf32>,
    %c128_i32 = arith.constant 128 : i32
    %39 = arith.muli %arg1, %c128_i32 : i32
    %40 = tpu.iota {dimensions = array<i32: 0>} : vector<128x128xi32>
    %41 = vector.broadcast %39 : i32 to vector<128x128xi32>
    %42 = arith.addi %41, %40 : vector<128x128xi32>
    %c128_i32_23 = arith.constant 128 : i32
    %43 = arith.muli %arg0, %c128_i32_23 : i32
    %44 = tpu.iota {dimensions = array<i32: 1>} : vector<128x128xi32>
    %45 = vector.broadcast %43 : i32 to vector<128x128xi32>
    %46 = arith.addi %45, %44 : vector<128x128xi32>
    %c32_i32 = arith.constant 32 : i32
    %47 = vector.broadcast %c32_i32 : i32 to vector<128x128xi32>
    %48 = arith.cmpi slt, %42, %47 : vector<128x128xi32>
    %c16_i32 = arith.constant 16 : i32
    %49 = vector.broadcast %c16_i32 : i32 to vector<128x128xi32>
    %50 = arith.cmpi slt, %46, %49 : vector<128x128xi32>
    %51 = arith.andi %48, %50 : vector<128x128xi1>
    %cst_24 = arith.constant 9.99999997E-7 : f32
    %cst_25 = arith.constant 0.999998986 : f32
    %52 = vector.broadcast %cst_24 : f32 to vector<128x128xf32>
    %53 = arith.maximumf %52, %12 : vector<128x128xf32>
    %54 = vector.broadcast %cst_25 : f32 to vector<128x128xf32>
    %55 = arith.minimumf %54, %53 : vector<128x128xf32>
    %56 = math.log %20 : vector<128x128xf32>
    %cst_26 = arith.constant 0.000000e+00 : f32
    %57 = vector.broadcast %cst_26 : f32 to vector<128x128xf32>
    %58 = arith.subf %57, %56 : vector<128x128xf32>
    %cst_27 = arith.constant 5.000000e-01 : f32
    %59 = vector.broadcast %cst_27 : f32 to vector<128x128xf32>
    %60 = arith.subf %58, %59 : vector<128x128xf32>
    %cst_28 = arith.constant 2.500000e-01 : f32
    %61 = vector.broadcast %cst_28 : f32 to vector<128x128xf32>
    %62 = arith.divf %55, %61 : vector<128x128xf32>
    %63 = math.log %62 : vector<128x128xf32>
    %64 = arith.addf %60, %63 : vector<128x128xf32>
    %65 = arith.mulf %20, %20 : vector<128x128xf32>
    %66 = arith.mulf %3, %3 : vector<128x128xf32>
    %67 = arith.addf %65, %66 : vector<128x128xf32>
    %cst_29 = arith.constant 5.000000e-01 : f32
    %68 = vector.broadcast %cst_29 : f32 to vector<128x128xf32>
    %69 = arith.mulf %68, %67 : vector<128x128xf32>
    %70 = arith.addf %64, %69 : vector<128x128xf32>
    %71 = arith.mulf %12, %70 : vector<128x128xf32>
    %cst_30 = arith.constant 1.000000e+00 : f32
    %72 = vector.broadcast %cst_30 : f32 to vector<128x128xf32>
    %73 = arith.subf %72, %12 : vector<128x128xf32>
    %cst_31 = arith.constant 1.000000e+00 : f32
    %74 = vector.broadcast %cst_31 : f32 to vector<128x128xf32>
    %75 = arith.subf %74, %55 : vector<128x128xf32>
    %cst_32 = arith.constant 7.500000e-01 : f32
    %76 = vector.broadcast %cst_32 : f32 to vector<128x128xf32>
    %77 = arith.divf %75, %76 : vector<128x128xf32>
    %78 = math.log %77 : vector<128x128xf32>
    %79 = arith.mulf %73, %78 : vector<128x128xf32>
    %80 = arith.addf %71, %79 : vector<128x128xf32>
    %c0_33 = arith.constant 0 : index
    %81 = memref.load %arg13[%c0_33] : memref<1xf32, #tpu.memory_space<smem>>
    %cst_34 = arith.constant 0.000000e+00 : f32
    %82 = vector.broadcast %cst_34 : f32 to vector<128x128xf32>
    %83 = arith.select %51, %80, %82 : vector<128x128xi1>, vector<128x128xf32>
    %84 = vector.shape_cast %83 : vector<128x128xf32> to vector<1x128x128xf32>
    %cst_35 = arith.constant dense<0.000000e+00> : vector<1xf32>
    %85 = vector.multi_reduction <add>, %84, %cst_35 [1, 2] : vector<1x128x128xf32> to vector<1xf32>
    %86 = vector.shape_cast %85 : vector<1xf32> to vector<1x1x1xf32>
    %87 = vector.extract %86[0, 0, 0] : f32 from vector<1x1x1xf32>
    %88 = arith.addf %81, %87 : f32
    %c0_36 = arith.constant 0 : index
    %89 = memref.load %arg13[%c0_36] : memref<1xf32, #tpu.memory_space<smem>>
    memref.store %88, %arg13[%c0_36] : memref<1xf32, #tpu.memory_space<smem>>
    %c0_i32_37 = arith.constant 0 : i32
    %90 = arith.cmpi eq, %arg1, %c0_i32_37 : i32
    %91 = arith.extui %90 : i1 to i32
    %c0_i32_38 = arith.constant 0 : i32
    %92 = arith.cmpi ne, %91, %c0_i32_38 : i32
    scf.if %92 {
      %c0_39 = arith.constant 0 : index
      %c0_40 = arith.constant 0 : index
      %93 = vector.load %arg6[%c0_39, %c0_40] : memref<1x128xf32, #tpu.memory_space<vmem>>, vector<1x128xf32>
      %c0_41 = arith.constant 0 : index
      %c0_42 = arith.constant 0 : index
      %94 = vector.load %arg7[%c0_41, %c0_42] : memref<1x128xf32, #tpu.memory_space<vmem>>, vector<1x128xf32>
      %cst_43 = arith.constant 0.000000e+00 : f32
      %95 = vector.broadcast %cst_43 : f32 to vector<1x128xf32>
      %96 = arith.maximumf %94, %95 : vector<1x128xf32>
      %97 = math.absf %94 : vector<1x128xf32>
      %cst_44 = arith.constant 0.000000e+00 : f32
      %98 = vector.broadcast %cst_44 : f32 to vector<1x128xf32>
      %99 = arith.subf %98, %97 : vector<1x128xf32>
      %100 = math.exp %99 : vector<1x128xf32>
      %101 = math.log1p %100 : vector<1x128xf32>
      %102 = arith.addf %96, %101 : vector<1x128xf32>
      %c0_45 = arith.constant 0 : index
      %c0_46 = arith.constant 0 : index
      %103 = vector.load %arg11[%c0_45, %c0_46] : memref<8x128xf32, #tpu.memory_space<vmem>>, vector<8x128xf32>
      %104 = vector.broadcast %93 : vector<1x128xf32> to vector<8x128xf32>
      %105 = arith.addf %103, %104 : vector<8x128xf32>
      %c0_47 = arith.constant 0 : index
      %c0_48 = arith.constant 0 : index
      %106 = vector.load %arg12[%c0_47, %c0_48] : memref<8x128xf32, #tpu.memory_space<vmem>>, vector<8x128xf32>
      %107 = arith.mulf %102, %102 : vector<1x128xf32>
      %108 = vector.broadcast %107 : vector<1x128xf32> to vector<8x128xf32>
      %109 = arith.addf %106, %108 : vector<8x128xf32>
      %110 = math.sqrt %109 : vector<8x128xf32>
      %c0_49 = arith.constant 0 : index
      %c0_50 = arith.constant 0 : index
      %111 = vector.load %arg8[%c0_49, %c0_50] : memref<8x128xf32, #tpu.memory_space<vmem>>, vector<8x128xf32>
      %112 = arith.mulf %110, %111 : vector<8x128xf32>
      %113 = arith.addf %105, %112 : vector<8x128xf32>
      %c0_51 = arith.constant 0 : index
      %c0_52 = arith.constant 0 : index
      %114 = vector.load %arg9[%c0_51, %c0_52] : memref<8x128xf32, #tpu.memory_space<vmem>>, vector<8x128xf32>
      tpu.vector_store %arg9[%c0_51, %c0_52], %113 {strides = array<i32>} : memref<8x128xf32, #tpu.memory_space<vmem>>, vector<8x128xf32>,
      %115 = tpu.iota {dimensions = array<i32: 0>} : vector<8x128xi32>
      %116 = tpu.iota {dimensions = array<i32: 1>} : vector<8x128xi32>
      %c0_i32_53 = arith.constant 0 : i32
      %117 = vector.broadcast %c0_i32_53 : i32 to vector<8x128xi32>
      %118 = arith.cmpi eq, %115, %117 : vector<8x128xi32>
      %c0_i32_54 = arith.constant 0 : i32
      %119 = vector.broadcast %c0_i32_54 : i32 to vector<8x128xi32>
      %120 = arith.cmpi eq, %116, %119 : vector<8x128xi32>
      %121 = arith.andi %118, %120 : vector<8x128xi1>
      %c0_55 = arith.constant 0 : index
      %122 = memref.load %arg13[%c0_55] : memref<1xf32, #tpu.memory_space<smem>>
      %cst_56 = arith.constant 0.000000e+00 : f32
      %123 = vector.broadcast %122 : f32 to vector<8x128xf32>
      %124 = vector.broadcast %cst_56 : f32 to vector<8x128xf32>
      %125 = arith.select %121, %123, %124 : vector<8x128xi1>, vector<8x128xf32>
      %c0_57 = arith.constant 0 : index
      %c0_58 = arith.constant 0 : index
      %c0_59 = arith.constant 0 : index
      %126 = vector.load %arg10[%c0_57, %c0_58, %c0_59] : memref<1x8x128xf32, #tpu.memory_space<vmem>>, vector<1x8x128xf32>
      %127 = vector.shape_cast %126 : vector<1x8x128xf32> to vector<8x128xf32>
      %128 = vector.shape_cast %125 : vector<8x128xf32> to vector<1x8x128xf32>
      tpu.vector_store %arg10[%c0_57, %c0_58, %c0_59], %128 {strides = array<i32>} : memref<1x8x128xf32, #tpu.memory_space<vmem>>, vector<1x8x128xf32>,
    } else {
    }
    return
  }
  func.func @transform_0(%arg0: i32, %arg1: i32) -> (i32, i32) {
    %c0_i32 = arith.constant 0 : i32
    %c0_i32_0 = arith.constant 0 : i32
    return %c0_i32, %arg1 : i32, i32
  }
  func.func @transform_1(%arg0: i32, %arg1: i32) -> (i32, i32) {
    %c0_i32 = arith.constant 0 : i32
    return %arg1, %arg0 : i32, i32
  }
  func.func @transform_2(%arg0: i32, %arg1: i32) -> (i32, i32) {
    %c0_i32 = arith.constant 0 : i32
    return %arg1, %arg0 : i32, i32
  }
  func.func @transform_3(%arg0: i32, %arg1: i32) -> (i32, i32) {
    %c0_i32 = arith.constant 0 : i32
    return %arg1, %arg0 : i32, i32
  }
  func.func @transform_4(%arg0: i32, %arg1: i32) -> (i32, i32) {
    %c0_i32 = arith.constant 0 : i32
    %c0_i32_0 = arith.constant 0 : i32
    return %c0_i32, %arg0 : i32, i32
  }
  func.func @transform_5(%arg0: i32, %arg1: i32) -> (i32, i32) {
    %c0_i32 = arith.constant 0 : i32
    %c0_i32_0 = arith.constant 0 : i32
    return %c0_i32, %arg0 : i32, i32
  }
  func.func @transform_6(%arg0: i32, %arg1: i32) -> (i32, i32) {
    %c0_i32 = arith.constant 0 : i32
    %c0_i32_0 = arith.constant 0 : i32
    return %c0_i32, %arg0 : i32, i32
  }
  func.func @transform_7(%arg0: i32, %arg1: i32) -> (i32, i32) {
    %c0_i32 = arith.constant 0 : i32
    %c0_i32_0 = arith.constant 0 : i32
    return %c0_i32, %arg0 : i32, i32
  }
  func.func @transform_8(%arg0: i32, %arg1: i32) -> (i32, i32, i32) {
    %c0_i32 = arith.constant 0 : i32
    %c0_i32_0 = arith.constant 0 : i32
    %c0_i32_1 = arith.constant 0 : i32
    return %arg0, %c0_i32, %c0_i32_0 : i32, i32, i32
  }
}

</mosaic_0001>

<llo_original>
// kernel: tpu_custom_call.1
$region0: #{tpu_custom_call.1}
  #allocation0 [shape = 'u32[]', space=smem, size = 0x4, offset = 0x4, fixed_abs, tag = 'smem constant byte address 0x4 - core index']
  #allocation1 [shape = 'u32[144,128]{1,0:T(1,128)}', space=vmem, size = 0x12000, scoped, tag = 'internal scratch']
  #allocation2 [shape = 'f32[8,128]{1,0:T(8,128)}', space=vmem, size = 0x1000, scoped, tag = 'scratch operand']
  #allocation3 [shape = 'f32[8,128]{1,0:T(8,128)}', space=vmem, size = 0x1000, scoped, tag = 'scratch operand']
  #allocation4 [shape = 'f32[1]{0:T(128)}', space=smem, size = 0x200, scoped, tag = 'scratch operand']
  %s0 = inlined_call_operand.hbm [shape: f32[8,128], index: 0, kind: input, shape index: {}]
  %s1 = inlined_call_operand.hbm [shape: f32[128,128], index: 1, kind: input, shape index: {}]
  %s2 = inlined_call_operand.hbm [shape: f32[128,128], index: 2, kind: input, shape index: {}]
  %s3 = inlined_call_operand.hbm [shape: f32[128,128], index: 3, kind: input, shape index: {}]
  %s4 = inlined_call_operand.vmem [shape: f32[1,128], index: 4, kind: input, shape index: {}]
  %s5 = inlined_call_operand.vmem [shape: f32[1,128], index: 5, kind: input, shape index: {}]
  %s6 = inlined_call_operand.vmem [shape: f32[8,128], index: 6, kind: input, shape index: {}]
  %s7 = inlined_call_operand.hbm [shape: f32[8,128], index: 7, kind: output, shape index: {0}]
  %s8 = inlined_call_operand.hbm [shape: f32[1,8,128], index: 8, kind: output, shape index: {1}]
  %9 = xla_tuple %s7, %s8
  %s10 = sld [smem:[#allocation0]]
  $region70: #{tpu_custom_call.1} parent=0
    _
  %s12 = ssub.s32 1, %s10
  %s13 = scalar_select 0, %s12, %s10
  $region1: #{tpu_custom_call.1} parent=0
    #allocation5 [shape = 'u8[4096]{0}', space=vmem, size = 0x1000, scoped, tag = 'input window, operand 0, single buffered']
    #allocation6 [shape = 's32[1]{0}', space=sflag, size = 0x4, scoped, tag = 'scoped memory for tpu_custom_call.1']
    #allocation7 [shape = 's32[1]{0}', space=sflag, size = 0x4, scoped, tag = 'scoped memory for tpu_custom_call.1']
    #allocation8 [shape = 'u8[65536]{0}', space=vmem, size = 0x10000, scoped, tag = 'input window, operand 1, single buffered']
    #allocation9 [shape = 's32[1]{0}', space=sflag, size = 0x4, scoped, tag = 'scoped memory for tpu_custom_call.1']
    #allocation10 [shape = 'u8[65536]{0}', space=vmem, size = 0x10000, scoped, tag = 'input window, operand 2, single buffered']
    #allocation11 [shape = 'u8[65536]{0}', space=vmem, size = 0x10000, scoped, tag = 'input window, operand 3, single buffered']
    #allocation12 [shape = 's32[1]{0}', space=sflag, size = 0x4, scoped, tag = 'scoped memory for tpu_custom_call.1']
    #allocation13 [shape = 'u8[4096]{0}', space=vmem, size = 0x1000, scoped, tag = 'output window, operand 0, single buffered']
    #allocation14 [shape = 'u8[4096]{0}', space=vmem, size = 0x1000, scoped, tag = 'output window, operand 1, single buffered']
    #allocation15 [shape = 's32[1]{0}', space=sflag, size = 0x4, scoped, tag = 'scoped memory for tpu_custom_call.1']
    %14 = vsyncpa [#allocation6], 0
    %15 = vsyncpa [#allocation9], 0
    %16 = vsyncpa [#allocation12], 0
    %17 = vsyncpa [#allocation7], 0
    %18 = vsyncpa [#allocation15], 0
    // Predicated region
    $region2: #{tpu_custom_call.1} parent=1 // pred_check
      _
    $region3: #{tpu_custom_call.1} parent=1 // pred_check_branch
      %20 = sbr.rel (0) target = $region5
    $region4: #{tpu_custom_call.1} parent=1 // pred_region
      %s22 = ssub.s32 128, 128
      %23 = vsyncadd [#allocation6], %s22
      %s25 = sshll.u32 [#allocation5], 4
      %s26 = int_to_ptr.vmem [resolvable:$true] %s25
      %28 = dma.hbm_to_vmem [thread:$0]  %s0, 128, %s26, [#allocation6]
    $region5: #{tpu_custom_call.1} parent=1 // pred_fallthru
      _
    // Predicated region
    $region6: #{tpu_custom_call.1} parent=1 // pred_check
      _
    $region7: #{tpu_custom_call.1} parent=1 // pred_check_branch
      %30 = sbr.rel (0) target = $region9
    $region8: #{tpu_custom_call.1} parent=1 // pred_region
      %s32 = ssub.s32 2048, 2048
      %33 = vsyncadd [#allocation9], %s32
      %s34 = sshll.u32 [#allocation8], 4
      %s35 = int_to_ptr.vmem [resolvable:$true] %s34
      %40 = dma.hbm_to_vmem [thread:$0]  %s1, 2048, %s35, [#allocation9], 128, 128, 8
    $region9: #{tpu_custom_call.1} parent=1 // pred_fallthru
      _
    // Predicated region
    $region10: #{tpu_custom_call.1} parent=1 // pred_check
      _
    $region11: #{tpu_custom_call.1} parent=1 // pred_check_branch
      %42 = sbr.rel (0) target = $region13
    $region12: #{tpu_custom_call.1} parent=1 // pred_region
      %s44 = ssub.s32 2048, 2048
      %45 = vsyncadd [#allocation9], %s44
      %s46 = sshll.u32 [#allocation10], 4
      %s47 = int_to_ptr.vmem [resolvable:$true] %s46
      %52 = dma.hbm_to_vmem [thread:$0]  %s2, 2048, %s47, [#allocation9], 128, 128, 8
    $region13: #{tpu_custom_call.1} parent=1 // pred_fallthru
      _
    // Predicated region
    $region14: #{tpu_custom_call.1} parent=1 // pred_check
      _
    $region15: #{tpu_custom_call.1} parent=1 // pred_check_branch
      %54 = sbr.rel (0) target = $region17
    $region16: #{tpu_custom_call.1} parent=1 // pred_region
      %s56 = ssub.s32 2048, 2048
      %57 = vsyncadd [#allocation12], %s56
      %s58 = sshll.u32 [#allocation11], 4
      %s59 = int_to_ptr.vmem [resolvable:$true] %s58
      %64 = dma.hbm_to_vmem [thread:$0]  %s3, 2048, %s59, [#allocation12], 128, 128, 8
    $region17: #{tpu_custom_call.1} parent=1 // pred_fallthru
      _
    // Predicated region
    $region18: #{tpu_custom_call.1} parent=1 // pred_check
      _
    $region19: #{tpu_custom_call.1} parent=1 // pred_check_branch
      %66 = sbr.rel (0) target = $region21
    $region20: #{tpu_custom_call.1} parent=1 // pred_region
      _
    $region21: #{tpu_custom_call.1} parent=1 // pred_fallthru
      _
    // Predicated region
    $region22: #{tpu_custom_call.1} parent=1 // pred_check
      _
    $region23: #{tpu_custom_call.1} parent=1 // pred_check_branch
      %68 = sbr.rel (0) target = $region25
    $region24: #{tpu_custom_call.1} parent=1 // pred_region
      _
    $region25: #{tpu_custom_call.1} parent=1 // pred_fallthru
      _
    // Predicated region
    $region26: #{tpu_custom_call.1} parent=1 // pred_check
      _
    $region27: #{tpu_custom_call.1} parent=1 // pred_check_branch
      %70 = sbr.rel (0) target = $region29
    $region28: #{tpu_custom_call.1} parent=1 // pred_region
      _
    $region29: #{tpu_custom_call.1} parent=1 // pred_fallthru
      _
    // Predicated region
    $region30: #{tpu_custom_call.1} parent=1 // pred_check
      _
    $region31: #{tpu_custom_call.1} parent=1 // pred_check_branch
      %72 = sbr.rel (0) target = $region33
    $region32: #{tpu_custom_call.1} parent=1 // pred_region
      %73 = dma.done [#allocation6], 128
    $region33: #{tpu_custom_call.1} parent=1 // pred_fallthru
      _
    // Predicated region
    $region34: #{tpu_custom_call.1} parent=1 // pred_check
      _
    $region35: #{tpu_custom_call.1} parent=1 // pred_check_branch
      %75 = sbr.rel (0) target = $region37
    $region36: #{tpu_custom_call.1} parent=1 // pred_region
      %76 = dma.done [#allocation9], 2048
    $region37: #{tpu_custom_call.1} parent=1 // pred_fallthru
      _
    // Predicated region
    $region38: #{tpu_custom_call.1} parent=1 // pred_check
      _
    $region39: #{tpu_custom_call.1} parent=1 // pred_check_branch
      %78 = sbr.rel (0) target = $region41
    $region40: #{tpu_custom_call.1} parent=1 // pred_region
      %79 = dma.done [#allocation9], 2048
    $region41: #{tpu_custom_call.1} parent=1 // pred_fallthru
      _
    // Predicated region
    $region42: #{tpu_custom_call.1} parent=1 // pred_check
      _
    $region43: #{tpu_custom_call.1} parent=1 // pred_check_branch
      %81 = sbr.rel (0) target = $region45
    $region44: #{tpu_custom_call.1} parent=1 // pred_region
      %82 = dma.done [#allocation12], 2048
    $region45: #{tpu_custom_call.1} parent=1 // pred_fallthru
      _
    %p83 = scmp.eq.s32.totalorder 0, 0
    // Predicated region
    $region46: #{tpu_custom_call.1} parent=1 // pred_check
      %p84 = pneg %p83
    $region47: #{tpu_custom_call.1} parent=1 // pred_check_branch
      %86 = sbr.rel (%p84) target = $region49
    $region48: #{tpu_custom_call.1} parent=1 // pred_region
      %87 = vst [vmem:[#allocation2] sm:$0xff] 0.0
      %88 = vst [vmem:[#allocation3] sm:$0xff] 0.0
      %v89 = vld [vmem:[%s4] sm:$0x1]
      %v90 = vld [vmem:[%s5] sm:$0x1]
      %v91 = vmax.f32 %v90, 0.0
      %v92 = vand.u32 2147483647, %v90
      %v93 = vsub.f32 0.0, %v92
      %v94 = vmul.f32 %v93, 1.442695
      %v95 = vpow.pop %v94
      %v96 = vadd.f32 %v95, 1.0
      %v97 = vlog2.pop %v96
      %v98 = vmul.f32 %v97, 0.6931472
      %v99 = vmul.f32 -0.5, %v95
      %v100 = vadd.f32 %v99, 1.0
      %v101 = vmul.f32 %v100, %v95
      %v102 = vand.u32 2147483647, %v95
      %vm103 = vcmp.lt.f32.partialorder %v102, 0.0004427343
      %v104 = vsel %vm103, %v101, %v98
      %v105 = vadd.f32 %v91, %v104
      %s106 = smul.u32 0, 128
      %v107 = vlaneseq
      %v108 = vand.u32 %v107, 127
      %v109 = vstv %s106
      %v110 = vadd.s32 %v109, %v108
      %vm111 = vcmp.lt.s32.totalorder %v110, 16
      %v112 = vlog2.pop %v105
      %v113 = vmul.f32 %v112, 0.6931472
      %v114 = vsub.f32 0.0, %v113
      %v115 = vsub.f32 %v114, 0.5
      %v116 = vmul.f32 %v105, %v105
      %v117 = vmul.f32 %v89, %v89
      %v118 = vadd.f32 %v116, %v117
      %v119 = vmul.f32 %v118, 0.5
      %v120 = vadd.f32 %v115, %v119
      %v121 = vsel %vm111, %v120, 0.0
      %vm122 = vcmask 1040384
      %v123 = vsel %vm122, %v121, 0.0
      %124 = vadd.xlane.f32.xlu0 %v123
      %v125 = vpop.xlane.xlu0 %124
      %v126 = vrot.slane %v125, 4
      %v127 = vadd.f32 %v125, %v126
      %v128 = vrot.slane %v127, 2
      %v129 = vadd.f32 %v127, %v128
      %v130 = vrot.slane %v129, 1
      %v131 = vadd.f32 %v129, %v130
      %s132 = vtos %v131
      %s133 = scalar_lea.smem [#allocation4], 0
      %134 = sst [smem:[%s133]] %s132
    $region49: #{tpu_custom_call.1} parent=1 // pred_fallthru
      _
    %v135 = vld [vmem:[#allocation8] sm:$0xff]
    %v136 = vld [vmem:[#allocation8 + $0x8] sm:$0xff]
    %v137 = vld [vmem:[#allocation8 + $0x10] sm:$0xff]
    %v138 = vld [vmem:[#allocation8 + $0x18] sm:$0xff]
    %v139 = vld [vmem:[#allocation8 + $0x20] sm:$0xff]
    %v140 = vld [vmem:[#allocation8 + $0x28] sm:$0xff]
    %v141 = vld [vmem:[#allocation8 + $0x30] sm:$0xff]
    %v142 = vld [vmem:[#allocation8 + $0x38] sm:$0xff]
    %v143 = vld [vmem:[#allocation8 + $0x40] sm:$0xff]
    %v144 = vld [vmem:[#allocation8 + $0x48] sm:$0xff]
    %v145 = vld [vmem:[#allocation8 + $0x50] sm:$0xff]
    %v146 = vld [vmem:[#allocation8 + $0x58] sm:$0xff]
    %v147 = vld [vmem:[#allocation8 + $0x60] sm:$0xff]
    %v148 = vld [vmem:[#allocation8 + $0x68] sm:$0xff]
    %v149 = vld [vmem:[#allocation8 + $0x70] sm:$0xff]
    %v150 = vld [vmem:[#allocation8 + $0x78] sm:$0xff]
    %v151 = vld [vmem:[#allocation10] sm:$0xff]
    %v152 = vld [vmem:[#allocation10 + $0x8] sm:$0xff]
    %v153 = vld [vmem:[#allocation10 + $0x10] sm:$0xff]
    %v154 = vld [vmem:[#allocation10 + $0x18] sm:$0xff]
    %v155 = vld [vmem:[#allocation10 + $0x20] sm:$0xff]
    %v156 = vld [vmem:[#allocation10 + $0x28] sm:$0xff]
    %v157 = vld [vmem:[#allocation10 + $0x30] sm:$0xff]
    %v158 = vld [vmem:[#allocation10 + $0x38] sm:$0xff]
    %v159 = vld [vmem:[#allocation10 + $0x40] sm:$0xff]
    %v160 = vld [vmem:[#allocation10 + $0x48] sm:$0xff]
    %v161 = vld [vmem:[#allocation10 + $0x50] sm:$0xff]
    %v162 = vld [vmem:[#allocation10 + $0x58] sm:$0xff]
    %v163 = vld [vmem:[#allocation10 + $0x60] sm:$0xff]
    %v164 = vld [vmem:[#allocation10 + $0x68] sm:$0xff]
    %v165 = vld [vmem:[#allocation10 + $0x70] sm:$0xff]
    %v166 = vld [vmem:[#allocation10 + $0x78] sm:$0xff]
    %v167 = vld [vmem:[#allocation11] sm:$0xff]
    %v168 = vld [vmem:[#allocation11 + $0x8] sm:$0xff]
    %v169 = vld [vmem:[#allocation11 + $0x10] sm:$0xff]
    %v170 = vld [vmem:[#allocation11 + $0x18] sm:$0xff]
    %v171 = vld [vmem:[#allocation11 + $0x20] sm:$0xff]
    %v172 = vld [vmem:[#allocation11 + $0x28] sm:$0xff]
    %v173 = vld [vmem:[#allocation11 + $0x30] sm:$0xff]
    %v174 = vld [vmem:[#allocation11 + $0x38] sm:$0xff]
    %v175 = vld [vmem:[#allocation11 + $0x40] sm:$0xff]
    %v176 = vld [vmem:[#allocation11 + $0x48] sm:$0xff]
    %v177 = vld [vmem:[#allocation11 + $0x50] sm:$0xff]
    %v178 = vld [vmem:[#allocation11 + $0x58] sm:$0xff]
    %v179 = vld [vmem:[#allocation11 + $0x60] sm:$0xff]
    %v180 = vld [vmem:[#allocation11 + $0x68] sm:$0xff]
    %v181 = vld [vmem:[#allocation11 + $0x70] sm:$0xff]
    %v182 = vld [vmem:[#allocation11 + $0x78] sm:$0xff]
    %v183 = vsub.f32 0.0, %v167
    %v184 = vsub.f32 0.0, %v168
    %v185 = vsub.f32 0.0, %v169
    %v186 = vsub.f32 0.0, %v170
    %v187 = vsub.f32 0.0, %v171
    %v188 = vsub.f32 0.0, %v172
    %v189 = vsub.f32 0.0, %v173
    %v190 = vsub.f32 0.0, %v174
    %v191 = vsub.f32 0.0, %v175
    %v192 = vsub.f32 0.0, %v176
    %v193 = vsub.f32 0.0, %v177
    %v194 = vsub.f32 0.0, %v178
    %v195 = vsub.f32 0.0, %v179
    %v196 = vsub.f32 0.0, %v180
    %v197 = vsub.f32 0.0, %v181
    %v198 = vsub.f32 0.0, %v182
    %v199 = vmul.f32 %v183, 1.442695
    %v200 = vpow.pop %v199
    %v201 = vmul.f32 %v184, 1.442695
    %v202 = vpow.pop %v201
    %v203 = vmul.f32 %v185, 1.442695
    %v204 = vpow.pop %v203
    %v205 = vmul.f32 %v186, 1.442695
    %v206 = vpow.pop %v205
    %v207 = vmul.f32 %v187, 1.442695
    %v208 = vpow.pop %v207
    %v209 = vmul.f32 %v188, 1.442695
    %v210 = vpow.pop %v209
    %v211 = vmul.f32 %v189, 1.442695
    %v212 = vpow.pop %v211
    %v213 = vmul.f32 %v190, 1.442695
    %v214 = vpow.pop %v213
    %v215 = vmul.f32 %v191, 1.442695
    %v216 = vpow.pop %v215
    %v217 = vmul.f32 %v192, 1.442695
    %v218 = vpow.pop %v217
    %v219 = vmul.f32 %v193, 1.442695
    %v220 = vpow.pop %v219
    %v221 = vmul.f32 %v194, 1.442695
    %v222 = vpow.pop %v221
    %v223 = vmul.f32 %v195, 1.442695
    %v224 = vpow.pop %v223
    %v225 = vmul.f32 %v196, 1.442695
    %v226 = vpow.pop %v225
    %v227 = vmul.f32 %v197, 1.442695
    %v228 = vpow.pop %v227
    %v229 = vmul.f32 %v198, 1.442695
    %v230 = vpow.pop %v229
    %v231 = vadd.f32 %v200, 1.0
    %v232 = vadd.f32 %v202, 1.0
    %v233 = vadd.f32 %v204, 1.0
    %v234 = vadd.f32 %v206, 1.0
    %v235 = vadd.f32 %v208, 1.0
    %v236 = vadd.f32 %v210, 1.0
    %v237 = vadd.f32 %v212, 1.0
    %v238 = vadd.f32 %v214, 1.0
    %v239 = vadd.f32 %v216, 1.0
    %v240 = vadd.f32 %v218, 1.0
    %v241 = vadd.f32 %v220, 1.0
    %v242 = vadd.f32 %v222, 1.0
    %v243 = vadd.f32 %v224, 1.0
    %v244 = vadd.f32 %v226, 1.0
    %v245 = vadd.f32 %v228, 1.0
    %v246 = vadd.f32 %v230, 1.0
    %v247 = vrcp.pop %v231
    %v248 = vmul.f32 1.0, %v247
    %v249 = vrcp.pop %v232
    %v250 = vmul.f32 1.0, %v249
    %v251 = vrcp.pop %v233
    %v252 = vmul.f32 1.0, %v251
    %v253 = vrcp.pop %v234
    %v254 = vmul.f32 1.0, %v253
    %v255 = vrcp.pop %v235
    %v256 = vmul.f32 1.0, %v255
    %v257 = vrcp.pop %v236
    %v258 = vmul.f32 1.0, %v257
    %v259 = vrcp.pop %v237
    %v260 = vmul.f32 1.0, %v259
    %v261 = vrcp.pop %v238
    %v262 = vmul.f32 1.0, %v261
    %v263 = vrcp.pop %v239
    %v264 = vmul.f32 1.0, %v263
    %v265 = vrcp.pop %v240
    %v266 = vmul.f32 1.0, %v265
    %v267 = vrcp.pop %v241
    %v268 = vmul.f32 1.0, %v267
    %v269 = vrcp.pop %v242
    %v270 = vmul.f32 1.0, %v269
    %v271 = vrcp.pop %v243
    %v272 = vmul.f32 1.0, %v271
    %v273 = vrcp.pop %v244
    %v274 = vmul.f32 1.0, %v273
    %v275 = vrcp.pop %v245
    %v276 = vmul.f32 1.0, %v275
    %v277 = vrcp.pop %v246
    %v278 = vmul.f32 1.0, %v277
    %v279 = vmax.f32 %v151, 0.0
    %v280 = vmax.f32 %v152, 0.0
    %v281 = vmax.f32 %v153, 0.0
    %v282 = vmax.f32 %v154, 0.0
    %v283 = vmax.f32 %v155, 0.0
    %v284 = vmax.f32 %v156, 0.0
    %v285 = vmax.f32 %v157, 0.0
    %v286 = vmax.f32 %v158, 0.0
    %v287 = vmax.f32 %v159, 0.0
    %v288 = vmax.f32 %v160, 0.0
    %v289 = vmax.f32 %v161, 0.0
    %v290 = vmax.f32 %v162, 0.0
    %v291 = vmax.f32 %v163, 0.0
    %v292 = vmax.f32 %v164, 0.0
    %v293 = vmax.f32 %v165, 0.0
    %v294 = vmax.f32 %v166, 0.0
    %v295 = vand.u32 2147483647, %v151
    %v296 = vand.u32 2147483647, %v152
    %v297 = vand.u32 2147483647, %v153
    %v298 = vand.u32 2147483647, %v154
    %v299 = vand.u32 2147483647, %v155
    %v300 = vand.u32 2147483647, %v156
    %v301 = vand.u32 2147483647, %v157
    %v302 = vand.u32 2147483647, %v158
    %v303 = vand.u32 2147483647, %v159
    %v304 = vand.u32 2147483647, %v160
    %v305 = vand.u32 2147483647, %v161
    %v306 = vand.u32 2147483647, %v162
    %v307 = vand.u32 2147483647, %v163
    %v308 = vand.u32 2147483647, %v164
    %v309 = vand.u32 2147483647, %v165
    %v310 = vand.u32 2147483647, %v166
    %v311 = vsub.f32 0.0, %v295
    %v312 = vsub.f32 0.0, %v296
    %v313 = vsub.f32 0.0, %v297
    %v314 = vsub.f32 0.0, %v298
    %v315 = vsub.f32 0.0, %v299
    %v316 = vsub.f32 0.0, %v300
    %v317 = vsub.f32 0.0, %v301
    %v318 = vsub.f32 0.0, %v302
    %v319 = vsub.f32 0.0, %v303
    %v320 = vsub.f32 0.0, %v304
    %v321 = vsub.f32 0.0, %v305
    %v322 = vsub.f32 0.0, %v306
    %v323 = vsub.f32 0.0, %v307
    %v324 = vsub.f32 0.0, %v308
    %v325 = vsub.f32 0.0, %v309
    %v326 = vsub.f32 0.0, %v310
    %v327 = vmul.f32 %v311, 1.442695
    %v328 = vpow.pop %v327
    %v329 = vmul.f32 %v312, 1.442695
    %v330 = vpow.pop %v329
    %v331 = vmul.f32 %v313, 1.442695
    %v332 = vpow.pop %v331
    %v333 = vmul.f32 %v314, 1.442695
    %v334 = vpow.pop %v333
    %v335 = vmul.f32 %v315, 1.442695
    %v336 = vpow.pop %v335
    %v337 = vmul.f32 %v316, 1.442695
    %v338 = vpow.pop %v337
    %v339 = vmul.f32 %v317, 1.442695
    %v340 = vpow.pop %v339
    %v341 = vmul.f32 %v318, 1.442695
    %v342 = vpow.pop %v341
    %v343 = vmul.f32 %v319, 1.442695
    %v344 = vpow.pop %v343
    %v345 = vmul.f32 %v320, 1.442695
    %v346 = vpow.pop %v345
    %v347 = vmul.f32 %v321, 1.442695
    %v348 = vpow.pop %v347
    %v349 = vmul.f32 %v322, 1.442695
    %v350 = vpow.pop %v349
    %v351 = vmul.f32 %v323, 1.442695
    %v352 = vpow.pop %v351
    %v353 = vmul.f32 %v324, 1.442695
    %v354 = vpow.pop %v353
    %v355 = vmul.f32 %v325, 1.442695
    %v356 = vpow.pop %v355
    %v357 = vmul.f32 %v326, 1.442695
    %v358 = vpow.pop %v357
    %v359 = vadd.f32 %v328, 1.0
    %v360 = vlog2.pop %v359
    %v361 = vmul.f32 %v360, 0.6931472
    %v362 = vmul.f32 -0.5, %v328
    %v363 = vadd.f32 %v362, 1.0
    %v364 = vmul.f32 %v363, %v328
    %v365 = vand.u32 2147483647, %v328
    %vm366 = vcmp.lt.f32.partialorder %v365, 0.0004427343
    %v367 = vsel %vm366, %v364, %v361
    %v368 = vadd.f32 %v330, 1.0
    %v369 = vlog2.pop %v368
    %v370 = vmul.f32 %v369, 0.6931472
    %v371 = vmul.f32 -0.5, %v330
    %v372 = vadd.f32 %v371, 1.0
    %v373 = vmul.f32 %v372, %v330
    %v374 = vand.u32 2147483647, %v330
    %vm375 = vcmp.lt.f32.partialorder %v374, 0.0004427343
    %v376 = vsel %vm375, %v373, %v370
    %v377 = vadd.f32 %v332, 1.0
    %v378 = vlog2.pop %v377
    %v379 = vmul.f32 %v378, 0.6931472
    %v380 = vmul.f32 -0.5, %v332
    %v381 = vadd.f32 %v380, 1.0
    %v382 = vmul.f32 %v381, %v332
    %v383 = vand.u32 2147483647, %v332
    %vm384 = vcmp.lt.f32.partialorder %v383, 0.0004427343
    %v385 = vsel %vm384, %v382, %v379
    %v386 = vadd.f32 %v334, 1.0
    %v387 = vlog2.pop %v386
    %v388 = vmul.f32 %v387, 0.6931472
    %v389 = vmul.f32 -0.5, %v334
    %v390 = vadd.f32 %v389, 1.0
    %v391 = vmul.f32 %v390, %v334
    %v392 = vand.u32 2147483647, %v334
    %vm393 = vcmp.lt.f32.partialorder %v392, 0.0004427343
    %v394 = vsel %vm393, %v391, %v388
    %v395 = vadd.f32 %v336, 1.0
    %v396 = vlog2.pop %v395
    %v397 = vmul.f32 %v396, 0.6931472
    %v398 = vmul.f32 -0.5, %v336
    %v399 = vadd.f32 %v398, 1.0
    %v400 = vmul.f32 %v399, %v336
    %v401 = vand.u32 2147483647, %v336
    %vm402 = vcmp.lt.f32.partialorder %v401, 0.0004427343
    %v403 = vsel %vm402, %v400, %v397
    %v404 = vadd.f32 %v338, 1.0
    %v405 = vlog2.pop %v404
    %v406 = vmul.f32 %v405, 0.6931472
    %v407 = vmul.f32 -0.5, %v338
    %v408 = vadd.f32 %v407, 1.0
    %v409 = vmul.f32 %v408, %v338
    %v410 = vand.u32 2147483647, %v338
    %vm411 = vcmp.lt.f32.partialorder %v410, 0.0004427343
    %v412 = vsel %vm411, %v409, %v406
    %v413 = vadd.f32 %v340, 1.0
    %v414 = vlog2.pop %v413
    %v415 = vmul.f32 %v414, 0.6931472
    %v416 = vmul.f32 -0.5, %v340
    %v417 = vadd.f32 %v416, 1.0
    %v418 = vmul.f32 %v417, %v340
    %v419 = vand.u32 2147483647, %v340
    %vm420 = vcmp.lt.f32.partialorder %v419, 0.0004427343
    %v421 = vsel %vm420, %v418, %v415
    %v422 = vadd.f32 %v342, 1.0
    %v423 = vlog2.pop %v422
    %v424 = vmul.f32 %v423, 0.6931472
    %v425 = vmul.f32 -0.5, %v342
    %v426 = vadd.f32 %v425, 1.0
    %v427 = vmul.f32 %v426, %v342
    %v428 = vand.u32 2147483647, %v342
    %vm429 = vcmp.lt.f32.partialorder %v428, 0.0004427343
    %v430 = vsel %vm429, %v427, %v424
    %v431 = vadd.f32 %v344, 1.0
    %v432 = vlog2.pop %v431
    %v433 = vmul.f32 %v432, 0.6931472
    %v434 = vmul.f32 -0.5, %v344
    %v435 = vadd.f32 %v434, 1.0
    %v436 = vmul.f32 %v435, %v344
    %v437 = vand.u32 2147483647, %v344
    %vm438 = vcmp.lt.f32.partialorder %v437, 0.0004427343
    %v439 = vsel %vm438, %v436, %v433
    %v440 = vadd.f32 %v346, 1.0
    %v441 = vlog2.pop %v440
    %v442 = vmul.f32 %v441, 0.6931472
    %v443 = vmul.f32 -0.5, %v346
    %v444 = vadd.f32 %v443, 1.0
    %v445 = vmul.f32 %v444, %v346
    %v446 = vand.u32 2147483647, %v346
    %vm447 = vcmp.lt.f32.partialorder %v446, 0.0004427343
    %v448 = vsel %vm447, %v445, %v442
    %v449 = vadd.f32 %v348, 1.0
    %v450 = vlog2.pop %v449
    %v451 = vmul.f32 %v450, 0.6931472
    %v452 = vmul.f32 -0.5, %v348
    %v453 = vadd.f32 %v452, 1.0
    %v454 = vmul.f32 %v453, %v348
    %v455 = vand.u32 2147483647, %v348
    %vm456 = vcmp.lt.f32.partialorder %v455, 0.0004427343
    %v457 = vsel %vm456, %v454, %v451
    %v458 = vadd.f32 %v350, 1.0
    %v459 = vlog2.pop %v458
    %v460 = vmul.f32 %v459, 0.6931472
    %v461 = vmul.f32 -0.5, %v350
    %v462 = vadd.f32 %v461, 1.0
    %v463 = vmul.f32 %v462, %v350
    %v464 = vand.u32 2147483647, %v350
    %vm465 = vcmp.lt.f32.partialorder %v464, 0.0004427343
    %v466 = vsel %vm465, %v463, %v460
    %v467 = vadd.f32 %v352, 1.0
    %v468 = vlog2.pop %v467
    %v469 = vmul.f32 %v468, 0.6931472
    %v470 = vmul.f32 -0.5, %v352
    %v471 = vadd.f32 %v470, 1.0
    %v472 = vmul.f32 %v471, %v352
    %v473 = vand.u32 2147483647, %v352
    %vm474 = vcmp.lt.f32.partialorder %v473, 0.0004427343
    %v475 = vsel %vm474, %v472, %v469
    %v476 = vadd.f32 %v354, 1.0
    %v477 = vlog2.pop %v476
    %v478 = vmul.f32 %v477, 0.6931472
    %v479 = vmul.f32 -0.5, %v354
    %v480 = vadd.f32 %v479, 1.0
    %v481 = vmul.f32 %v480, %v354
    %v482 = vand.u32 2147483647, %v354
    %vm483 = vcmp.lt.f32.partialorder %v482, 0.0004427343
    %v484 = vsel %vm483, %v481, %v478
    %v485 = vadd.f32 %v356, 1.0
    %v486 = vlog2.pop %v485
    %v487 = vmul.f32 %v486, 0.6931472
    %v488 = vmul.f32 -0.5, %v356
    %v489 = vadd.f32 %v488, 1.0
    %v490 = vmul.f32 %v489, %v356
    %v491 = vand.u32 2147483647, %v356
    %vm492 = vcmp.lt.f32.partialorder %v491, 0.0004427343
    %v493 = vsel %vm492, %v490, %v487
    %v494 = vadd.f32 %v358, 1.0
    %v495 = vlog2.pop %v494
    %v496 = vmul.f32 %v495, 0.6931472
    %v497 = vmul.f32 -0.5, %v358
    %v498 = vadd.f32 %v497, 1.0
    %v499 = vmul.f32 %v498, %v358
    %v500 = vand.u32 2147483647, %v358
    %vm501 = vcmp.lt.f32.partialorder %v500, 0.0004427343
    %v502 = vsel %vm501, %v499, %v496
    %v503 = vadd.f32 %v279, %v367
    %v504 = vadd.f32 %v280, %v376
    %v505 = vadd.f32 %v281, %v385
    %v506 = vadd.f32 %v282, %v394
    %v507 = vadd.f32 %v283, %v403
    %v508 = vadd.f32 %v284, %v412
    %v509 = vadd.f32 %v285, %v421
    %v510 = vadd.f32 %v286, %v430
    %v511 = vadd.f32 %v287, %v439
    %v512 = vadd.f32 %v288, %v448
    %v513 = vadd.f32 %v289, %v457
    %v514 = vadd.f32 %v290, %v466
    %v515 = vadd.f32 %v291, %v475
    %v516 = vadd.f32 %v292, %v484
    %v517 = vadd.f32 %v293, %v493
    %v518 = vadd.f32 %v294, %v502
    %v519 = vmul.f32 %v135, %v248
    %v520 = vmul.f32 %v136, %v250
    %v521 = vmul.f32 %v137, %v252
    %v522 = vmul.f32 %v138, %v254
    %v523 = vmul.f32 %v139, %v256
    %v524 = vmul.f32 %v140, %v258
    %v525 = vmul.f32 %v141, %v260
    %v526 = vmul.f32 %v142, %v262
    %v527 = vmul.f32 %v143, %v264
    %v528 = vmul.f32 %v144, %v266
    %v529 = vmul.f32 %v145, %v268
    %v530 = vmul.f32 %v146, %v270
    %v531 = vmul.f32 %v147, %v272
    %v532 = vmul.f32 %v148, %v274
    %v533 = vmul.f32 %v149, %v276
    %v534 = vmul.f32 %v150, %v278
    %v535 = vmul.f32 %v503, %v503
    %v536 = vmul.f32 %v504, %v504
    %v537 = vmul.f32 %v505, %v505
    %v538 = vmul.f32 %v506, %v506
    %v539 = vmul.f32 %v507, %v507
    %v540 = vmul.f32 %v508, %v508
    %v541 = vmul.f32 %v509, %v509
    %v542 = vmul.f32 %v510, %v510
    %v543 = vmul.f32 %v511, %v511
    %v544 = vmul.f32 %v512, %v512
    %v545 = vmul.f32 %v513, %v513
    %v546 = vmul.f32 %v514, %v514
    %v547 = vmul.f32 %v515, %v515
    %v548 = vmul.f32 %v516, %v516
    %v549 = vmul.f32 %v517, %v517
    %v550 = vmul.f32 %v518, %v518
    %v551 = vsub.f32 1.0, %v248
    %v552 = vsub.f32 1.0, %v250
    %v553 = vsub.f32 1.0, %v252
    %v554 = vsub.f32 1.0, %v254
    %v555 = vsub.f32 1.0, %v256
    %v556 = vsub.f32 1.0, %v258
    %v557 = vsub.f32 1.0, %v260
    %v558 = vsub.f32 1.0, %v262
    %v559 = vsub.f32 1.0, %v264
    %v560 = vsub.f32 1.0, %v266
    %v561 = vsub.f32 1.0, %v268
    %v562 = vsub.f32 1.0, %v270
    %v563 = vsub.f32 1.0, %v272
    %v564 = vsub.f32 1.0, %v274
    %v565 = vsub.f32 1.0, %v276
    %v566 = vsub.f32 1.0, %v278
    %v567 = vmul.f32 %v135, %v135
    %v568 = vmul.f32 %v136, %v136
    %v569 = vmul.f32 %v137, %v137
    %v570 = vmul.f32 %v138, %v138
    %v571 = vmul.f32 %v139, %v139
    %v572 = vmul.f32 %v140, %v140
    %v573 = vmul.f32 %v141, %v141
    %v574 = vmul.f32 %v142, %v142
    %v575 = vmul.f32 %v143, %v143
    %v576 = vmul.f32 %v144, %v144
    %v577 = vmul.f32 %v145, %v145
    %v578 = vmul.f32 %v146, %v146
    %v579 = vmul.f32 %v147, %v147
    %v580 = vmul.f32 %v148, %v148
    %v581 = vmul.f32 %v149, %v149
    %v582 = vmul.f32 %v150, %v150
    %v583 = vmul.f32 %v551, %v567
    %v584 = vmul.f32 %v552, %v568
    %v585 = vmul.f32 %v553, %v569
    %v586 = vmul.f32 %v554, %v570
    %v587 = vmul.f32 %v555, %v571
    %v588 = vmul.f32 %v556, %v572
    %v589 = vmul.f32 %v557, %v573
    %v590 = vmul.f32 %v558, %v574
    %v591 = vmul.f32 %v559, %v575
    %v592 = vmul.f32 %v560, %v576
    %v593 = vmul.f32 %v561, %v577
    %v594 = vmul.f32 %v562, %v578
    %v595 = vmul.f32 %v563, %v579
    %v596 = vmul.f32 %v564, %v580
    %v597 = vmul.f32 %v565, %v581
    %v598 = vmul.f32 %v566, %v582
    %v599 = vadd.f32 %v535, %v583
    %v600 = vadd.f32 %v536, %v584
    %v601 = vadd.f32 %v537, %v585
    %v602 = vadd.f32 %v538, %v586
    %v603 = vadd.f32 %v539, %v587
    %v604 = vadd.f32 %v540, %v588
    %v605 = vadd.f32 %v541, %v589
    %v606 = vadd.f32 %v542, %v590
    %v607 = vadd.f32 %v543, %v591
    %v608 = vadd.f32 %v544, %v592
    %v609 = vadd.f32 %v545, %v593
    %v610 = vadd.f32 %v546, %v594
    %v611 = vadd.f32 %v547, %v595
    %v612 = vadd.f32 %v548, %v596
    %v613 = vadd.f32 %v549, %v597
    %v614 = vadd.f32 %v550, %v598
    %v615 = vmul.f32 %v248, %v599
    %v616 = vmul.f32 %v250, %v600
    %v617 = vmul.f32 %v252, %v601
    %v618 = vmul.f32 %v254, %v602
    %v619 = vmul.f32 %v256, %v603
    %v620 = vmul.f32 %v258, %v604
    %v621 = vmul.f32 %v260, %v605
    %v622 = vmul.f32 %v262, %v606
    %v623 = vmul.f32 %v264, %v607
    %v624 = vmul.f32 %v266, %v608
    %v625 = vmul.f32 %v268, %v609
    %v626 = vmul.f32 %v270, %v610
    %v627 = vmul.f32 %v272, %v611
    %v628 = vmul.f32 %v274, %v612
    %v629 = vmul.f32 %v276, %v613
    %v630 = vmul.f32 %v278, %v614
    %v631 = vld [vmem:[#allocation5] sm:$0xff]
    %v632 = vld [vmem:[#allocation2] sm:$0xff]
    %633 = vmatprep.subr.mxu0 0.0
    %634 = vmatpush1.msra.mxu0 %v519
    %635 = vmatprep.subr.mxu0 0.0
    %636 = vmatpush1.msra.mxu0 %v520
    %637 = vmatprep.subr.mxu0 0.0
    %638 = vmatpush1.msra.mxu0 %v521
    %639 = vmatprep.subr.mxu0 0.0
    %640 = vmatpush1.msra.mxu0 %v522
    %641 = vmatprep.subr.mxu0 0.0
    %642 = vmatpush1.msra.mxu0 %v523
    %643 = vmatprep.subr.mxu0 0.0
    %644 = vmatpush1.msra.mxu0 %v524
    %645 = vmatprep.subr.mxu0 0.0
    %646 = vmatpush1.msra.mxu0 %v525
    %647 = vmatprep.subr.mxu0 0.0
    %648 = vmatpush1.msra.mxu0 %v526
    %649 = vmatprep.subr.mxu0 0.0
    %650 = vmatpush1.msra.mxu0 %v527
    %651 = vmatprep.subr.mxu0 0.0
    %652 = vmatpush1.msra.mxu0 %v528
    %653 = vmatprep.subr.mxu0 0.0
    %654 = vmatpush1.msra.mxu0 %v529
    %655 = vmatprep.subr.mxu0 0.0
    %656 = vmatpush1.msra.mxu0 %v530
    %657 = vmatprep.subr.mxu0 0.0
    %658 = vmatpush1.msra.mxu0 %v531
    %659 = vmatprep.subr.mxu0 0.0
    %660 = vmatpush1.msra.mxu0 %v532
    %661 = vmatprep.subr.mxu0 0.0
    %662 = vmatpush1.msra.mxu0 %v533
    %663 = vmatprep.subr.mxu0 0.0
    %664 = vmatpush1.msra.mxu0 %v534
    %665 = vmatprep.subr.mxu0 0.0
    %666 = vmatpush1.msra.mxu0 0.0
    %667 = vmatprep.subr.mxu0 0.0
    %668 = vmatpush1.msra.mxu0 0.0
    %669 = vmatprep.subr.mxu0 0.0
    %670 = vmatpush1.msra.mxu0 0.0
    %671 = vmatprep.subr.mxu0 0.0
    %672 = vmatpush1.msra.mxu0 0.0
    %673 = vmatprep.subr.mxu0 0.0
    %674 = vmatpush1.msra.mxu0 0.0
    %675 = vmatprep.subr.mxu0 0.0
    %676 = vmatpush1.msra.mxu0 0.0
    %677 = vmatprep.subr.mxu0 0.0
    %678 = vmatpush1.msra.mxu0 0.0
    %679 = vmatprep.subr.mxu0 0.0
    %680 = vmatpush1.msra.mxu0 0.0
    %681 = vmatprep.subr.mxu0 0.0
    %682 = vmatpush1.msra.mxu0 0.0
    %683 = vmatprep.subr.mxu0 0.0
    %684 = vmatpush1.msra.mxu0 0.0
    %685 = vmatprep.subr.mxu0 0.0
    %686 = vmatpush1.msra.mxu0 0.0
    %687 = vmatprep.subr.mxu0 0.0
    %688 = vmatpush1.msra.mxu0 0.0
    %689 = vmatprep.subr.mxu0 0.0
    %690 = vmatpush1.msra.mxu0 0.0
    %691 = vmatprep.subr.mxu0 0.0
    %692 = vmatpush1.msra.mxu0 0.0
    %693 = vmatprep.subr.mxu0 0.0
    %694 = vmatpush1.msra.mxu0 0.0
    %695 = vmatprep.subr.mxu0 0.0
    %696 = vmatpush1.msra.mxu0 0.0
    %697 = vmatprep.mubr.f32.mxu0 0.0
    %698 = vmatmul.mubr.f32.gmra.mrb[0].mxu0 %v631
    %v699 = vpop.f32.mrb[0].mxu0
    %v700 = vadd.f32 0.0, %v699
    %v701 = vpop.f32.mrb[0].mxu0
    %702 = vdwg.mxu0
    %v703 = vadd.f32 %v632, %v700
    %704 = vst [vmem:[#allocation2] sm:$0xff] %v703
    %v705 = vmul.f32 %v631, %v631
    %v706 = vld [vmem:[#allocation3] sm:$0xff]
    %707 = vmatprep.subr.mxu0 0.0
    %708 = vmatpush1.msra.mxu0 %v615
    %709 = vmatprep.subr.mxu0 0.0
    %710 = vmatpush1.msra.mxu0 %v616
    %711 = vmatprep.subr.mxu0 0.0
    %712 = vmatpush1.msra.mxu0 %v617
    %713 = vmatprep.subr.mxu0 0.0
    %714 = vmatpush1.msra.mxu0 %v618
    %715 = vmatprep.subr.mxu0 0.0
    %716 = vmatpush1.msra.mxu0 %v619
    %717 = vmatprep.subr.mxu0 0.0
    %718 = vmatpush1.msra.mxu0 %v620
    %719 = vmatprep.subr.mxu0 0.0
    %720 = vmatpush1.msra.mxu0 %v621
    %721 = vmatprep.subr.mxu0 0.0
    %722 = vmatpush1.msra.mxu0 %v622
    %723 = vmatprep.subr.mxu0 0.0
    %724 = vmatpush1.msra.mxu0 %v623
    %725 = vmatprep.subr.mxu0 0.0
    %726 = vmatpush1.msra.mxu0 %v624
    %727 = vmatprep.subr.mxu0 0.0
    %728 = vmatpush1.msra.mxu0 %v625
    %729 = vmatprep.subr.mxu0 0.0
    %730 = vmatpush1.msra.mxu0 %v626
    %731 = vmatprep.subr.mxu0 0.0
    %732 = vmatpush1.msra.mxu0 %v627
    %733 = vmatprep.subr.mxu0 0.0
    %734 = vmatpush1.msra.mxu0 %v628
    %735 = vmatprep.subr.mxu0 0.0
    %736 = vmatpush1.msra.mxu0 %v629
    %737 = vmatprep.subr.mxu0 0.0
    %738 = vmatpush1.msra.mxu0 %v630
    %739 = vmatprep.subr.mxu0 0.0
    %740 = vmatpush1.msra.mxu0 0.0
    %741 = vmatprep.subr.mxu0 0.0
    %742 = vmatpush1.msra.mxu0 0.0
    %743 = vmatprep.subr.mxu0 0.0
    %744 = vmatpush1.msra.mxu0 0.0
    %745 = vmatprep.subr.mxu0 0.0
    %746 = vmatpush1.msra.mxu0 0.0
    %747 = vmatprep.subr.mxu0 0.0
    %748 = vmatpush1.msra.mxu0 0.0
    %749 = vmatprep.subr.mxu0 0.0
    %750 = vmatpush1.msra.mxu0 0.0
    %751 = vmatprep.subr.mxu0 0.0
    %752 = vmatpush1.msra.mxu0 0.0
    %753 = vmatprep.subr.mxu0 0.0
    %754 = vmatpush1.msra.mxu0 0.0
    %755 = vmatprep.subr.mxu0 0.0
    %756 = vmatpush1.msra.mxu0 0.0
    %757 = vmatprep.subr.mxu0 0.0
    %758 = vmatpush1.msra.mxu0 0.0
    %759 = vmatprep.subr.mxu0 0.0
    %760 = vmatpush1.msra.mxu0 0.0
    %761 = vmatprep.subr.mxu0 0.0
    %762 = vmatpush1.msra.mxu0 0.0
    %763 = vmatprep.subr.mxu0 0.0
    %764 = vmatpush1.msra.mxu0 0.0
    %765 = vmatprep.subr.mxu0 0.0
    %766 = vmatpush1.msra.mxu0 0.0
    %767 = vmatprep.subr.mxu0 0.0
    %768 = vmatpush1.msra.mxu0 0.0
    %769 = vmatprep.subr.mxu0 0.0
    %770 = vmatpush1.msra.mxu0 0.0
    %771 = vmatprep.mubr.f32.mxu0 0.0
    %772 = vmatmul.mubr.f32.gmra.mrb[0].mxu0 %v705
    %v773 = vpop.f32.mrb[0].mxu0
    %v774 = vadd.f32 0.0, %v773
    %v775 = vpop.f32.mrb[0].mxu0
    %776 = vdwg.mxu0
    %v777 = vadd.f32 %v706, %v774
    %778 = vst [vmem:[#allocation3] sm:$0xff] %v777
    %s779 = smul.u32 0, 128
    %v780 = vlaneseq
    %v781 = vshrl.u32 %v780, 7
    %v782 = vadd.s32 %v781, 8
    %v783 = vadd.s32 %v781, 16
    %v784 = vadd.s32 %v781, 24
    %v785 = vadd.s32 %v781, 32
    %v786 = vadd.s32 %v781, 40
    %v787 = vadd.s32 %v781, 48
    %v788 = vadd.s32 %v781, 56
    %v789 = vadd.s32 %v781, 64
    %v790 = vadd.s32 %v781, 72
    %v791 = vadd.s32 %v781, 80
    %v792 = vadd.s32 %v781, 88
    %v793 = vadd.s32 %v781, 96
    %v794 = vadd.s32 %v781, 104
    %v795 = vadd.s32 %v781, 112
    %v796 = vadd.s32 %v781, 120
    %v797 = vstv %s779
    %v798 = vadd.s32 %v797, %v781
    %v799 = vadd.s32 %v797, %v782
    %v800 = vadd.s32 %v797, %v783
    %v801 = vadd.s32 %v797, %v784
    %v802 = vadd.s32 %v797, %v785
    %v803 = vadd.s32 %v797, %v786
    %v804 = vadd.s32 %v797, %v787
    %v805 = vadd.s32 %v797, %v788
    %v806 = vadd.s32 %v797, %v789
    %v807 = vadd.s32 %v797, %v790
    %v808 = vadd.s32 %v797, %v791
    %v809 = vadd.s32 %v797, %v792
    %v810 = vadd.s32 %v797, %v793
    %v811 = vadd.s32 %v797, %v794
    %v812 = vadd.s32 %v797, %v795
    %v813 = vadd.s32 %v797, %v796
    %s814 = smul.u32 0, 128
    %v815 = vlaneseq
    %v816 = vand.u32 %v815, 127
    %v817 = vstv %s814
    %v818 = vadd.s32 %v817, %v816
    %vm819 = vcmp.lt.s32.totalorder %v798, 32
    %vm820 = vcmp.lt.s32.totalorder %v799, 32
    %vm821 = vcmp.lt.s32.totalorder %v800, 32
    %vm822 = vcmp.lt.s32.totalorder %v801, 32
    %vm823 = vcmp.lt.s32.totalorder %v802, 32
    %vm824 = vcmp.lt.s32.totalorder %v803, 32
    %vm825 = vcmp.lt.s32.totalorder %v804, 32
    %vm826 = vcmp.lt.s32.totalorder %v805, 32
    %vm827 = vcmp.lt.s32.totalorder %v806, 32
    %vm828 = vcmp.lt.s32.totalorder %v807, 32
    %vm829 = vcmp.lt.s32.totalorder %v808, 32
    %vm830 = vcmp.lt.s32.totalorder %v809, 32
    %vm831 = vcmp.lt.s32.totalorder %v810, 32
    %vm832 = vcmp.lt.s32.totalorder %v811, 32
    %vm833 = vcmp.lt.s32.totalorder %v812, 32
    %vm834 = vcmp.lt.s32.totalorder %v813, 32
    %vm835 = vcmp.lt.s32.totalorder %v818, 16
    %vm836 = vmand %vm819, %vm835
    %vm837 = vmand %vm820, %vm835
    %vm838 = vmand %vm821, %vm835
    %vm839 = vmand %vm822, %vm835
    %vm840 = vmand %vm823, %vm835
    %vm841 = vmand %vm824, %vm835
    %vm842 = vmand %vm825, %vm835
    %vm843 = vmand %vm826, %vm835
    %vm844 = vmand %vm827, %vm835
    %vm845 = vmand %vm828, %vm835
    %vm846 = vmand %vm829, %vm835
    %vm847 = vmand %vm830, %vm835
    %vm848 = vmand %vm831, %vm835
    %vm849 = vmand %vm832, %vm835
    %vm850 = vmand %vm833, %vm835
    %vm851 = vmand %vm834, %vm835
    %v852 = vmax.f32 %v248, 1e-06
    %v853 = vmax.f32 %v250, 1e-06
    %v854 = vmax.f32 %v252, 1e-06
    %v855 = vmax.f32 %v254, 1e-06
    %v856 = vmax.f32 %v256, 1e-06
    %v857 = vmax.f32 %v258, 1e-06
    %v858 = vmax.f32 %v260, 1e-06
    %v859 = vmax.f32 %v262, 1e-06
    %v860 = vmax.f32 %v264, 1e-06
    %v861 = vmax.f32 %v266, 1e-06
    %v862 = vmax.f32 %v268, 1e-06
    %v863 = vmax.f32 %v270, 1e-06
    %v864 = vmax.f32 %v272, 1e-06
    %v865 = vmax.f32 %v274, 1e-06
    %v866 = vmax.f32 %v276, 1e-06
    %v867 = vmax.f32 %v278, 1e-06
    %v868 = vmin.f32 %v852, 0.999999
    %v869 = vmin.f32 %v853, 0.999999
    %v870 = vmin.f32 %v854, 0.999999
    %v871 = vmin.f32 %v855, 0.999999
    %v872 = vmin.f32 %v856, 0.999999
    %v873 = vmin.f32 %v857, 0.999999
    %v874 = vmin.f32 %v858, 0.999999
    %v875 = vmin.f32 %v859, 0.999999
    %v876 = vmin.f32 %v860, 0.999999
    %v877 = vmin.f32 %v861, 0.999999
    %v878 = vmin.f32 %v862, 0.999999
    %v879 = vmin.f32 %v863, 0.999999
    %v880 = vmin.f32 %v864, 0.999999
    %v881 = vmin.f32 %v865, 0.999999
    %v882 = vmin.f32 %v866, 0.999999
    %v883 = vmin.f32 %v867, 0.999999
    %v884 = vlog2.pop %v503
    %v885 = vmul.f32 %v884, 0.6931472
    %v886 = vlog2.pop %v504
    %v887 = vmul.f32 %v886, 0.6931472
    %v888 = vlog2.pop %v505
    %v889 = vmul.f32 %v888, 0.6931472
    %v890 = vlog2.pop %v506
    %v891 = vmul.f32 %v890, 0.6931472
    %v892 = vlog2.pop %v507
    %v893 = vmul.f32 %v892, 0.6931472
    %v894 = vlog2.pop %v508
    %v895 = vmul.f32 %v894, 0.6931472
    %v896 = vlog2.pop %v509
    %v897 = vmul.f32 %v896, 0.6931472
    %v898 = vlog2.pop %v510
    %v899 = vmul.f32 %v898, 0.6931472
    %v900 = vlog2.pop %v511
    %v901 = vmul.f32 %v900, 0.6931472
    %v902 = vlog2.pop %v512
    %v903 = vmul.f32 %v902, 0.6931472
    %v904 = vlog2.pop %v513
    %v905 = vmul.f32 %v904, 0.6931472
    %v906 = vlog2.pop %v514
    %v907 = vmul.f32 %v906, 0.6931472
    %v908 = vlog2.pop %v515
    %v909 = vmul.f32 %v908, 0.6931472
    %v910 = vlog2.pop %v516
    %v911 = vmul.f32 %v910, 0.6931472
    %v912 = vlog2.pop %v517
    %v913 = vmul.f32 %v912, 0.6931472
    %v914 = vlog2.pop %v518
    %v915 = vmul.f32 %v914, 0.6931472
    %v916 = vsub.f32 0.0, %v885
    %v917 = vsub.f32 0.0, %v887
    %v918 = vsub.f32 0.0, %v889
    %v919 = vsub.f32 0.0, %v891
    %v920 = vsub.f32 0.0, %v893
    %v921 = vsub.f32 0.0, %v895
    %v922 = vsub.f32 0.0, %v897
    %v923 = vsub.f32 0.0, %v899
    %v924 = vsub.f32 0.0, %v901
    %v925 = vsub.f32 0.0, %v903
    %v926 = vsub.f32 0.0, %v905
    %v927 = vsub.f32 0.0, %v907
    %v928 = vsub.f32 0.0, %v909
    %v929 = vsub.f32 0.0, %v911
    %v930 = vsub.f32 0.0, %v913
    %v931 = vsub.f32 0.0, %v915
    %v932 = vsub.f32 %v916, 0.5
    %v933 = vsub.f32 %v917, 0.5
    %v934 = vsub.f32 %v918, 0.5
    %v935 = vsub.f32 %v919, 0.5
    %v936 = vsub.f32 %v920, 0.5
    %v937 = vsub.f32 %v921, 0.5
    %v938 = vsub.f32 %v922, 0.5
    %v939 = vsub.f32 %v923, 0.5
    %v940 = vsub.f32 %v924, 0.5
    %v941 = vsub.f32 %v925, 0.5
    %v942 = vsub.f32 %v926, 0.5
    %v943 = vsub.f32 %v927, 0.5
    %v944 = vsub.f32 %v928, 0.5
    %v945 = vsub.f32 %v929, 0.5
    %v946 = vsub.f32 %v930, 0.5
    %v947 = vsub.f32 %v931, 0.5
    %v948 = vrcp.pop 0.25
    %v949 = vmul.f32 %v868, %v948
    %v950 = vmul.f32 %v869, %v948
    %v951 = vmul.f32 %v870, %v948
    %v952 = vmul.f32 %v871, %v948
    %v953 = vmul.f32 %v872, %v948
    %v954 = vmul.f32 %v873, %v948
    %v955 = vmul.f32 %v874, %v948
    %v956 = vmul.f32 %v875, %v948
    %v957 = vmul.f32 %v876, %v948
    %v958 = vmul.f32 %v877, %v948
    %v959 = vmul.f32 %v878, %v948
    %v960 = vmul.f32 %v879, %v948
    %v961 = vmul.f32 %v880, %v948
    %v962 = vmul.f32 %v881, %v948
    %v963 = vmul.f32 %v882, %v948
    %v964 = vmul.f32 %v883, %v948
    %v965 = vlog2.pop %v949
    %v966 = vmul.f32 %v965, 0.6931472
    %v967 = vlog2.pop %v950
    %v968 = vmul.f32 %v967, 0.6931472
    %v969 = vlog2.pop %v951
    %v970 = vmul.f32 %v969, 0.6931472
    %v971 = vlog2.pop %v952
    %v972 = vmul.f32 %v971, 0.6931472
    %v973 = vlog2.pop %v953
    %v974 = vmul.f32 %v973, 0.6931472
    %v975 = vlog2.pop %v954
    %v976 = vmul.f32 %v975, 0.6931472
    %v977 = vlog2.pop %v955
    %v978 = vmul.f32 %v977, 0.6931472
    %v979 = vlog2.pop %v956
    %v980 = vmul.f32 %v979, 0.6931472
    %v981 = vlog2.pop %v957
    %v982 = vmul.f32 %v981, 0.6931472
    %v983 = vlog2.pop %v958
    %v984 = vmul.f32 %v983, 0.6931472
    %v985 = vlog2.pop %v959
    %v986 = vmul.f32 %v985, 0.6931472
    %v987 = vlog2.pop %v960
    %v988 = vmul.f32 %v987, 0.6931472
    %v989 = vlog2.pop %v961
    %v990 = vmul.f32 %v989, 0.6931472
    %v991 = vlog2.pop %v962
    %v992 = vmul.f32 %v991, 0.6931472
    %v993 = vlog2.pop %v963
    %v994 = vmul.f32 %v993, 0.6931472
    %v995 = vlog2.pop %v964
    %v996 = vmul.f32 %v995, 0.6931472
    %v997 = vadd.f32 %v932, %v966
    %v998 = vadd.f32 %v933, %v968
    %v999 = vadd.f32 %v934, %v970
    %v1000 = vadd.f32 %v935, %v972
    %v1001 = vadd.f32 %v936, %v974
    %v1002 = vadd.f32 %v937, %v976
    %v1003 = vadd.f32 %v938, %v978
    %v1004 = vadd.f32 %v939, %v980
    %v1005 = vadd.f32 %v940, %v982
    %v1006 = vadd.f32 %v941, %v984
    %v1007 = vadd.f32 %v942, %v986
    %v1008 = vadd.f32 %v943, %v988
    %v1009 = vadd.f32 %v944, %v990
    %v1010 = vadd.f32 %v945, %v992
    %v1011 = vadd.f32 %v946, %v994
    %v1012 = vadd.f32 %v947, %v996
    %v1013 = vadd.f32 %v535, %v567
    %v1014 = vadd.f32 %v536, %v568
    %v1015 = vadd.f32 %v537, %v569
    %v1016 = vadd.f32 %v538, %v570
    %v1017 = vadd.f32 %v539, %v571
    %v1018 = vadd.f32 %v540, %v572
    %v1019 = vadd.f32 %v541, %v573
    %v1020 = vadd.f32 %v542, %v574
    %v1021 = vadd.f32 %v543, %v575
    %v1022 = vadd.f32 %v544, %v576
    %v1023 = vadd.f32 %v545, %v577
    %v1024 = vadd.f32 %v546, %v578
    %v1025 = vadd.f32 %v547, %v579
    %v1026 = vadd.f32 %v548, %v580
    %v1027 = vadd.f32 %v549, %v581
    %v1028 = vadd.f32 %v550, %v582
    %v1029 = vmul.f32 %v1013, 0.5
    %v1030 = vmul.f32 %v1014, 0.5
    %v1031 = vmul.f32 %v1015, 0.5
    %v1032 = vmul.f32 %v1016, 0.5
    %v1033 = vmul.f32 %v1017, 0.5
    %v1034 = vmul.f32 %v1018, 0.5
    %v1035 = vmul.f32 %v1019, 0.5
    %v1036 = vmul.f32 %v1020, 0.5
    %v1037 = vmul.f32 %v1021, 0.5
    %v1038 = vmul.f32 %v1022, 0.5
    %v1039 = vmul.f32 %v1023, 0.5
    %v1040 = vmul.f32 %v1024, 0.5
    %v1041 = vmul.f32 %v1025, 0.5
    %v1042 = vmul.f32 %v1026, 0.5
    %v1043 = vmul.f32 %v1027, 0.5
    %v1044 = vmul.f32 %v1028, 0.5
    %v1045 = vadd.f32 %v997, %v1029
    %v1046 = vadd.f32 %v998, %v1030
    %v1047 = vadd.f32 %v999, %v1031
    %v1048 = vadd.f32 %v1000, %v1032
    %v1049 = vadd.f32 %v1001, %v1033
    %v1050 = vadd.f32 %v1002, %v1034
    %v1051 = vadd.f32 %v1003, %v1035
    %v1052 = vadd.f32 %v1004, %v1036
    %v1053 = vadd.f32 %v1005, %v1037
    %v1054 = vadd.f32 %v1006, %v1038
    %v1055 = vadd.f32 %v1007, %v1039
    %v1056 = vadd.f32 %v1008, %v1040
    %v1057 = vadd.f32 %v1009, %v1041
    %v1058 = vadd.f32 %v1010, %v1042
    %v1059 = vadd.f32 %v1011, %v1043
    %v1060 = vadd.f32 %v1012, %v1044
    %v1061 = vmul.f32 %v248, %v1045
    %v1062 = vmul.f32 %v250, %v1046
    %v1063 = vmul.f32 %v252, %v1047
    %v1064 = vmul.f32 %v254, %v1048
    %v1065 = vmul.f32 %v256, %v1049
    %v1066 = vmul.f32 %v258, %v1050
    %v1067 = vmul.f32 %v260, %v1051
    %v1068 = vmul.f32 %v262, %v1052
    %v1069 = vmul.f32 %v264, %v1053
    %v1070 = vmul.f32 %v266, %v1054
    %v1071 = vmul.f32 %v268, %v1055
    %v1072 = vmul.f32 %v270, %v1056
    %v1073 = vmul.f32 %v272, %v1057
    %v1074 = vmul.f32 %v274, %v1058
    %v1075 = vmul.f32 %v276, %v1059
    %v1076 = vmul.f32 %v278, %v1060
    %v1077 = vsub.f32 1.0, %v868
    %v1078 = vsub.f32 1.0, %v869
    %v1079 = vsub.f32 1.0, %v870
    %v1080 = vsub.f32 1.0, %v871
    %v1081 = vsub.f32 1.0, %v872
    %v1082 = vsub.f32 1.0, %v873
    %v1083 = vsub.f32 1.0, %v874
    %v1084 = vsub.f32 1.0, %v875
    %v1085 = vsub.f32 1.0, %v876
    %v1086 = vsub.f32 1.0, %v877
    %v1087 = vsub.f32 1.0, %v878
    %v1088 = vsub.f32 1.0, %v879
    %v1089 = vsub.f32 1.0, %v880
    %v1090 = vsub.f32 1.0, %v881
    %v1091 = vsub.f32 1.0, %v882
    %v1092 = vsub.f32 1.0, %v883
    %v1093 = vrcp.pop 0.75
    %v1094 = vmul.f32 %v1077, %v1093
    %v1095 = vmul.f32 %v1078, %v1093
    %v1096 = vmul.f32 %v1079, %v1093
    %v1097 = vmul.f32 %v1080, %v1093
    %v1098 = vmul.f32 %v1081, %v1093
    %v1099 = vmul.f32 %v1082, %v1093
    %v1100 = vmul.f32 %v1083, %v1093
    %v1101 = vmul.f32 %v1084, %v1093
    %v1102 = vmul.f32 %v1085, %v1093
    %v1103 = vmul.f32 %v1086, %v1093
    %v1104 = vmul.f32 %v1087, %v1093
    %v1105 = vmul.f32 %v1088, %v1093
    %v1106 = vmul.f32 %v1089, %v1093
    %v1107 = vmul.f32 %v1090, %v1093
    %v1108 = vmul.f32 %v1091, %v1093
    %v1109 = vmul.f32 %v1092, %v1093
    %v1110 = vlog2.pop %v1094
    %v1111 = vmul.f32 %v1110, 0.6931472
    %v1112 = vlog2.pop %v1095
    %v1113 = vmul.f32 %v1112, 0.6931472
    %v1114 = vlog2.pop %v1096
    %v1115 = vmul.f32 %v1114, 0.6931472
    %v1116 = vlog2.pop %v1097
    %v1117 = vmul.f32 %v1116, 0.6931472
    %v1118 = vlog2.pop %v1098
    %v1119 = vmul.f32 %v1118, 0.6931472
    %v1120 = vlog2.pop %v1099
    %v1121 = vmul.f32 %v1120, 0.6931472
    %v1122 = vlog2.pop %v1100
    %v1123 = vmul.f32 %v1122, 0.6931472
    %v1124 = vlog2.pop %v1101
    %v1125 = vmul.f32 %v1124, 0.6931472
    %v1126 = vlog2.pop %v1102
    %v1127 = vmul.f32 %v1126, 0.6931472
    %v1128 = vlog2.pop %v1103
    %v1129 = vmul.f32 %v1128, 0.6931472
    %v1130 = vlog2.pop %v1104
    %v1131 = vmul.f32 %v1130, 0.6931472
    %v1132 = vlog2.pop %v1105
    %v1133 = vmul.f32 %v1132, 0.6931472
    %v1134 = vlog2.pop %v1106
    %v1135 = vmul.f32 %v1134, 0.6931472
    %v1136 = vlog2.pop %v1107
    %v1137 = vmul.f32 %v1136, 0.6931472
    %v1138 = vlog2.pop %v1108
    %v1139 = vmul.f32 %v1138, 0.6931472
    %v1140 = vlog2.pop %v1109
    %v1141 = vmul.f32 %v1140, 0.6931472
    %v1142 = vmul.f32 %v551, %v1111
    %v1143 = vmul.f32 %v552, %v1113
    %v1144 = vmul.f32 %v553, %v1115
    %v1145 = vmul.f32 %v554, %v1117
    %v1146 = vmul.f32 %v555, %v1119
    %v1147 = vmul.f32 %v556, %v1121
    %v1148 = vmul.f32 %v557, %v1123
    %v1149 = vmul.f32 %v558, %v1125
    %v1150 = vmul.f32 %v559, %v1127
    %v1151 = vmul.f32 %v560, %v1129
    %v1152 = vmul.f32 %v561, %v1131
    %v1153 = vmul.f32 %v562, %v1133
    %v1154 = vmul.f32 %v563, %v1135
    %v1155 = vmul.f32 %v564, %v1137
    %v1156 = vmul.f32 %v565, %v1139
    %v1157 = vmul.f32 %v566, %v1141
    %v1158 = vadd.f32 %v1061, %v1142
    %v1159 = vadd.f32 %v1062, %v1143
    %v1160 = vadd.f32 %v1063, %v1144
    %v1161 = vadd.f32 %v1064, %v1145
    %v1162 = vadd.f32 %v1065, %v1146
    %v1163 = vadd.f32 %v1066, %v1147
    %v1164 = vadd.f32 %v1067, %v1148
    %v1165 = vadd.f32 %v1068, %v1149
    %v1166 = vadd.f32 %v1069, %v1150
    %v1167 = vadd.f32 %v1070, %v1151
    %v1168 = vadd.f32 %v1071, %v1152
    %v1169 = vadd.f32 %v1072, %v1153
    %v1170 = vadd.f32 %v1073, %v1154
    %v1171 = vadd.f32 %v1074, %v1155
    %v1172 = vadd.f32 %v1075, %v1156
    %v1173 = vadd.f32 %v1076, %v1157
    %s1174 = sld [smem:[#allocation4]]
    %v1175 = vsel %vm836, %v1158, 0.0
    %v1176 = vsel %vm837, %v1159, 0.0
    %v1177 = vsel %vm838, %v1160, 0.0
    %v1178 = vsel %vm839, %v1161, 0.0
    %v1179 = vsel %vm840, %v1162, 0.0
    %v1180 = vsel %vm841, %v1163, 0.0
    %v1181 = vsel %vm842, %v1164, 0.0
    %v1182 = vsel %vm843, %v1165, 0.0
    %v1183 = vsel %vm844, %v1166, 0.0
    %v1184 = vsel %vm845, %v1167, 0.0
    %v1185 = vsel %vm846, %v1168, 0.0
    %v1186 = vsel %vm847, %v1169, 0.0
    %v1187 = vsel %vm848, %v1170, 0.0
    %v1188 = vsel %vm849, %v1171, 0.0
    %v1189 = vsel %vm850, %v1172, 0.0
    %v1190 = vsel %vm851, %v1173, 0.0
    %v1191 = vadd.f32 %v1175, %v1176
    %v1192 = vadd.f32 %v1191, %v1177
    %v1193 = vadd.f32 %v1192, %v1178
    %v1194 = vadd.f32 %v1193, %v1179
    %v1195 = vadd.f32 %v1194, %v1180
    %v1196 = vadd.f32 %v1195, %v1181
    %v1197 = vadd.f32 %v1196, %v1182
    %v1198 = vadd.f32 %v1197, %v1183
    %v1199 = vadd.f32 %v1198, %v1184
    %v1200 = vadd.f32 %v1199, %v1185
    %v1201 = vadd.f32 %v1200, %v1186
    %v1202 = vadd.f32 %v1201, %v1187
    %v1203 = vadd.f32 %v1202, %v1188
    %v1204 = vadd.f32 %v1203, %v1189
    %v1205 = vadd.f32 %v1204, %v1190
    %1206 = vadd.xlane.f32.xlu0 %v1205
    %v1207 = vpop.xlane.xlu0 %1206
    %v1208 = vrot.slane %v1207, 4
    %v1209 = vadd.f32 %v1207, %v1208
    %v1210 = vrot.slane %v1209, 2
    %v1211 = vadd.f32 %v1209, %v1210
    %v1212 = vrot.slane %v1211, 1
    %v1213 = vadd.f32 %v1211, %v1212
    %s1214 = vtos %v1213
    %s1215 = sadd.f32 %s1174, %s1214
    %s1216 = scalar_lea.smem [#allocation4], 0
    %1217 = sst [smem:[%s1216]] %s1215
    // Predicated region
    $region50: #{tpu_custom_call.1} parent=1 // pred_check
      %p1218 = pneg %p83
    $region51: #{tpu_custom_call.1} parent=1 // pred_check_branch
      %1220 = sbr.rel (%p1218) target = $region53
    $region52: #{tpu_custom_call.1} parent=1 // pred_region
      %v1221 = vld [vmem:[%s4] sm:$0x1]
      %v1222 = vld [vmem:[%s5] sm:$0x1]
      %v1223 = vmax.f32 %v1222, 0.0
      %v1224 = vand.u32 2147483647, %v1222
      %v1225 = vsub.f32 0.0, %v1224
      %v1226 = vmul.f32 %v1225, 1.442695
      %v1227 = vpow.pop %v1226
      %v1228 = vadd.f32 %v1227, 1.0
      %v1229 = vlog2.pop %v1228
      %v1230 = vmul.f32 %v1229, 0.6931472
      %v1231 = vmul.f32 -0.5, %v1227
      %v1232 = vadd.f32 %v1231, 1.0
      %v1233 = vmul.f32 %v1232, %v1227
      %v1234 = vand.u32 2147483647, %v1227
      %vm1235 = vcmp.lt.f32.partialorder %v1234, 0.0004427343
      %v1236 = vsel %vm1235, %v1233, %v1230
      %v1237 = vadd.f32 %v1223, %v1236
      %v1238 = vld [vmem:[#allocation2] sm:$0xff]
      %v1240 = vlaneseq
      %v1241 = vshrl.u32 %v1240, 7
      %v1242 = vsub.s32 0, %v1241
      %v1243 = vrot.slane %v1221, %v1242
      %v1245 = vadd.f32 %v1238, %v1243
      %v1246 = vld [vmem:[#allocation3] sm:$0xff]
      %v1247 = vmul.f32 %v1237, %v1237
      %v1249 = vlaneseq
      %v1250 = vshrl.u32 %v1249, 7
      %v1251 = vsub.s32 0, %v1250
      %v1252 = vrot.slane %v1247, %v1251
      %v1254 = vadd.f32 %v1246, %v1252
      %v1255 = vrsqrt.pop %v1254
      %v1256 = vmul.f32 %v1254, %v1255
      %vm1257 = vcmp.eq.f32.partialorder %v1254, inf
      %v1258 = vsel %vm1257, %v1254, %v1256
      %vm1259 = vcmp.eq.f32.partialorder %v1254, 0.0
      %v1260 = vand.u32 %v1254, 2147483648
      %v1261 = vsel %vm1259, %v1260, %v1258
      %v1262 = vld [vmem:[%s6] sm:$0xff]
      %v1263 = vmul.f32 %v1261, %v1262
      %v1264 = vadd.f32 %v1245, %v1263
      %1265 = vst [vmem:[#allocation13] sm:$0xff] %v1264
      %vm1266 = vcmp.eq.s32.totalorder %v781, 0
      %vm1267 = vcmp.eq.s32.totalorder %v816, 0
      %vm1268 = vmand %vm1266, %vm1267
      %s1269 = sld [smem:[#allocation4]]
      %v1270 = vstv %s1269
      %v1271 = vsel %vm1268, %v1270, 0.0
      %1272 = vst [vmem:[#allocation14] sm:$0xff] %v1271
    $region53: #{tpu_custom_call.1} parent=1 // pred_fallthru
      _
    // Predicated region
    $region54: #{tpu_custom_call.1} parent=1 // pred_check
      _
    $region55: #{tpu_custom_call.1} parent=1 // pred_check_branch
      %1274 = sbr.rel (0) target = $region57
    $region56: #{tpu_custom_call.1} parent=1 // pred_region
      %s1276 = ssub.s32 128, 128
      %1277 = vsyncadd [#allocation7], %s1276
      %s1279 = sshll.u32 [#allocation13], 4
      %s1280 = int_to_ptr.vmem [resolvable:$true] %s1279
      %1282 = dma.vmem_to_hbm [thread:$0]  %s1280, 128, %s7, [#allocation7]
    $region57: #{tpu_custom_call.1} parent=1 // pred_fallthru
      _
    // Predicated region
    $region58: #{tpu_custom_call.1} parent=1 // pred_check
      _
    $region59: #{tpu_custom_call.1} parent=1 // pred_check_branch
      %1284 = sbr.rel (0) target = $region61
    $region60: #{tpu_custom_call.1} parent=1 // pred_region
      %s1286 = ssub.s32 128, 128
      %1287 = vsyncadd [#allocation15], %s1286
      %s1289 = sshll.u32 [#allocation14], 4
      %s1290 = int_to_ptr.vmem [resolvable:$true] %s1289
      %1292 = dma.vmem_to_hbm [thread:$0]  %s1290, 128, %s8, [#allocation15]
    $region61: #{tpu_custom_call.1} parent=1 // pred_fallthru
      _
    // Predicated region
    $region62: #{tpu_custom_call.1} parent=1 // pred_check
      _
    $region63: #{tpu_custom_call.1} parent=1 // pred_check_branch
      %1294 = sbr.rel (0) target = $region65
    $region64: #{tpu_custom_call.1} parent=1 // pred_region
      %1295 = dma.done [#allocation7], 128
    $region65: #{tpu_custom_call.1} parent=1 // pred_fallthru
      _
    // Predicated region
    $region66: #{tpu_custom_call.1} parent=1 // pred_check
      _
    $region67: #{tpu_custom_call.1} parent=1 // pred_check_branch
      %1297 = sbr.rel (0) target = $region69
    $region68: #{tpu_custom_call.1} parent=1 // pred_region
      %1298 = dma.done [#allocation15], 128
    $region69: #{tpu_custom_call.1} parent=1 // pred_fallthru
      _
    %1299 = vsyncpa [#allocation6], 1
    %1300 = vsyncpa [#allocation9], 1
    %1301 = vsyncpa [#allocation12], 1
    %1302 = vsyncpa [#allocation7], 1
    %1303 = vsyncpa [#allocation15], 1

</llo_original>
